<compile_context>
chip_gen: v6e
topology: v6e:2x2x1
jax: 0.10.0
libtpu: 0.0.40
codegen_flags: <defaults>
</compile_context>

<pallas_src>
import functools

import jax
import jax.numpy as jnp
from jax.experimental import pallas as pl
from jax.experimental.pallas import tpu as pltpu

LANE = 128      # pad all feature dims to the lane width for dense stores
SUBLANE = 8
VMEM_BUDGET_BYTES = 20 * 1024 * 1024   # conservative across v5e/v6e/v7x scoped VMEM


# ------------------------------ helpers --------------------------------------

def _round_up(x, m):
    return (x + m - 1) // m * m


def _pad_2d(w, rows, cols):
    return jnp.pad(w, ((0, rows - w.shape[0]), (0, cols - w.shape[1])))


def _compiler_params(dimension_semantics):
    return pltpu.CompilerParams(
        dimension_semantics=dimension_semantics,
        vmem_limit_bytes=32 * 1024 * 1024,
    )


def _full_spec(arr):
    # Whole-array block (bypasses the (8,128) divisibility requirement).
    return pl.BlockSpec(arr.shape, lambda i: (0,) * arr.ndim)


# ----------------------- fused single-launch kernel --------------------------

def fused_gcn_kernel(a_ref, xw1_ref, b1_ref, w2_ref, b2_ref, p_ref,
                     lw1_ref, lb1_ref, drop_ref, lw2_ref, lb2_ref, o_ref):
    """conv1+ReLU -> conv2 -> global_mean_pool -> lin1 -> dropout -> lin2."""
    a = a_ref[...]                                                # A read once (bf16)
    # conv1: A @ (X@W1) + b1, ReLU.  XW1 precomputed outside (real cin contraction).
    h1 = jnp.dot(a, xw1_ref[...], preferred_element_type=jnp.float32) + b1_ref[...]
    h1 = jnp.maximum(h1, 0.0)
    # conv2: A @ (H1 @ W2) + b2  -- H1@W2 computed exactly once (hoisted).
    hw2 = jnp.dot(h1.astype(jnp.bfloat16), w2_ref[...],
                  preferred_element_type=jnp.float32)
    h2 = jnp.dot(a, hw2.astype(jnp.bfloat16),
                 preferred_element_type=jnp.float32) + b2_ref[...]
    # global_mean_pool as pooled = P @ H2 (P rows already divided by counts).
    pooled = jnp.dot(p_ref[...], h2, preferred_element_type=jnp.float32)
    # MLP head: lin1 -> dropout(p=0.5, training) -> lin2.
    y = jnp.dot(pooled, lw1_ref[...], preferred_element_type=jnp.float32) + lb1_ref[...]
    y = y * drop_ref[...]
    o_ref[...] = jnp.dot(y, lw2_ref[...],
                         preferred_element_type=jnp.float32) + lb2_ref[...]


def fused_gcn(a, xw1, b1, w2, b2, pool, lw1, lb1, drop_scale, lw2, lb2):
    n = a.shape[0]
    g = pool.shape[0]
    flops = (2 * n * n * LANE * 2          # two A @ (N,128) aggregations
             + 2 * n * LANE * LANE         # H1 @ W2
             + 2 * g * n * LANE            # pooling
             + 2 * g * LANE * LANE * 2)    # lin1 + lin2
    bytes_accessed = (a.size * a.dtype.itemsize
                      + xw1.size * xw1.dtype.itemsize
                      + w2.size * w2.dtype.itemsize
                      + (lw1.size + lw2.size + pool.size) * 4
                      + (b1.size + b2.size + lb1.size + lb2.size
                         + drop_scale.size) * 4
                      + g * LANE * 4)
    args = (a, xw1, b1, w2, b2, pool, lw1, lb1, drop_scale, lw2, lb2)
    return pl.pallas_call(
        fused_gcn_kernel,
        out_shape=jax.ShapeDtypeStruct((g, LANE), jnp.float32),
        grid_spec=pltpu.PrefetchScalarGridSpec(
            num_scalar_prefetch=0,
            grid=(1,),
            in_specs=[_full_spec(x) for x in args],
            out_specs=pl.BlockSpec((g, LANE), lambda i: (0, 0)),
        ),
        compiler_params=_compiler_params(("arbitrary",)),
        cost_estimate=pl.CostEstimate(flops=flops, transcendentals=0,
                                      bytes_accessed=bytes_accessed),
    )(*args)


# -------------------- tiled fallback (graphs too big for VMEM) ----------------

def gcn_agg_kernel(a_ref, h_ref, b_ref, o_ref, acc_ref, *, apply_relu):
    """out[i] = sum_k A[i,k] @ H[k] + b  (H = X@W precomputed, nothing recomputed)."""
    k = pl.program_id(1)

    @pl.when(k == 0)
    def _():
        acc_ref[...] = jnp.zeros_like(acc_ref)

    acc_ref[...] += jnp.dot(a_ref[...], h_ref[...],
                            preferred_element_type=jnp.float32)

    @pl.when(k == pl.num_programs(1) - 1)
    def _():
        out = acc_ref[...] + b_ref[...]
        if apply_relu:
            out = jnp.maximum(out, 0.0)
        o_ref[...] = out.astype(o_ref.dtype)


def gcn_agg(a, h, b, *, apply_relu, tile, out_dtype):
    n = a.shape[0]
    c = h.shape[1]
    grid = (n // tile, n // tile)
    flops = 2 * n * n * c
    bytes_accessed = (a.size * a.dtype.itemsize
                      + grid[0] * h.size * h.dtype.itemsize
                      + b.size * 4 + n * c * jnp.dtype(out_dtype).itemsize)
    return pl.pallas_call(
        functools.partial(gcn_agg_kernel, apply_relu=apply_relu),
        out_shape=jax.ShapeDtypeStruct((n, c), out_dtype),
        grid_spec=pltpu.PrefetchScalarGridSpec(
            num_scalar_prefetch=0,
            grid=grid,
            in_specs=[
                pl.BlockSpec((tile, tile), lambda i, k: (i, k)),   # A tile
                pl.BlockSpec((tile, c), lambda i, k: (k, 0)),      # H k-strip
                pl.BlockSpec(b.shape, lambda i, k: (0, 0)),        # bias
            ],
            out_specs=pl.BlockSpec((tile, c), lambda i, k: (i, 0)),
            scratch_shapes=[pltpu.VMEM((tile, c), jnp.float32)],
        ),
        compiler_params=_compiler_params(("parallel", "arbitrary")),
        cost_estimate=pl.CostEstimate(flops=flops, transcendentals=0,
                                      bytes_accessed=bytes_accessed),
    )(a, h, b)


def rows_matmul_kernel(h_ref, w_ref, o_ref):
    o_ref[...] = jnp.dot(h_ref[...], w_ref[...],
                         preferred_element_type=jnp.float32).astype(o_ref.dtype)


def rows_matmul(h, w, *, tile, out_dtype):
    """Row-tiled H @ W (hoists the per-layer feature transform out of gcn_agg)."""
    n = h.shape[0]
    return pl.pallas_call(
        rows_matmul_kernel,
        out_shape=jax.ShapeDtypeStruct((n, w.shape[1]), out_dtype),
        grid_spec=pltpu.PrefetchScalarGridSpec(
            num_scalar_prefetch=0,
            grid=(n // tile,),
            in_specs=[pl.BlockSpec((tile, h.shape[1]), lambda i: (i, 0)),
                      pl.BlockSpec(w.shape, lambda i: (0, 0))],
            out_specs=pl.BlockSpec((tile, w.shape[1]), lambda i: (i, 0)),
        ),
        compiler_params=_compiler_params(("parallel",)),
    )(h, w)


def pool_head_kernel(p_ref, h2_ref, lw1_ref, lb1_ref, drop_ref, lw2_ref, lb2_ref,
                     o_ref, pooled_ref):
    k = pl.program_id(0)

    @pl.when(k == 0)
    def _():
        pooled_ref[...] = jnp.zeros_like(pooled_ref)

    pooled_ref[...] += jnp.dot(p_ref[...], h2_ref[...],
                               preferred_element_type=jnp.float32)

    @pl.when(k == pl.num_programs(0) - 1)
    def _():
        y = jnp.dot(pooled_ref[...], lw1_ref[...],
                    preferred_element_type=jnp.float32) + lb1_ref[...]
        y = y * drop_ref[...]
        o_ref[...] = jnp.dot(y, lw2_ref[...],
                             preferred_element_type=jnp.float32) + lb2_ref[...]


def pool_head(pool, h2, lw1, lb1, drop_scale, lw2, lb2, *, tile):
    n = h2.shape[0]
    g = pool.shape[0]
    return pl.pallas_call(
        pool_head_kernel,
        out_shape=jax.ShapeDtypeStruct((g, LANE), jnp.float32),
        grid_spec=pltpu.PrefetchScalarGridSpec(
            num_scalar_prefetch=0,
            grid=(n // tile,),
            in_specs=[
                pl.BlockSpec((g, tile), lambda k: (0, k)),      # pooling cols
                pl.BlockSpec((tile, LANE), lambda k: (k, 0)),   # H2 strip
                pl.BlockSpec(lw1.shape, lambda k: (0, 0)),
                pl.BlockSpec(lb1.shape, lambda k: (0, 0)),
                pl.BlockSpec(drop_scale.shape, lambda k: (0, 0)),
                pl.BlockSpec(lw2.shape, lambda k: (0, 0)),
                pl.BlockSpec(lb2.shape, lambda k: (0, 0)),
            ],
            out_specs=pl.BlockSpec((g, LANE), lambda k: (0, 0)),
            scratch_shapes=[pltpu.VMEM((g, LANE), jnp.float32)],
        ),
        compiler_params=_compiler_params(("arbitrary",)),
    )(pool, h2, lw1, lb1, drop_scale, lw2, lb2)


# ------------------------------ JAX glue -------------------------------------

def normalized_adjacency(edge_index, edge_weight, num_nodes):
    """PyG GCNConv normalization: add self loops (weight 1), sym-normalize."""
    # TODO(synk): for large sparse graphs keep CSR + scalar-prefetch row-gather
    # instead of materializing the dense O(N^2) adjacency.
    src, dst = edge_index[0], edge_index[1]
    loop = jnp.arange(num_nodes, dtype=src.dtype)
    src = jnp.concatenate([src, loop])
    dst = jnp.concatenate([dst, loop])
    w = jnp.concatenate([edge_weight.astype(jnp.float32),
                         jnp.ones((num_nodes,), jnp.float32)])
    deg = jnp.zeros((num_nodes,), jnp.float32).at[dst].add(w)
    dinv = jnp.where(deg > 0, jax.lax.rsqrt(deg), 0.0)
    norm = dinv[src] * w * dinv[dst]
    # message flows src -> dst: out[dst] += norm * x[src]
    a = jnp.zeros((num_nodes, num_nodes), jnp.float32).at[dst, src].add(norm)
    return a.astype(jnp.bfloat16)     # bf16 MXU operand (~bf16-precision parity)


def pooling_matrix(batch, num_graphs, g_pad, n_pad):
    onehot = (batch[None, :] == jnp.arange(num_graphs)[:, None]).astype(jnp.float32)
    counts = jnp.maximum(onehot.sum(axis=1, keepdims=True), 1.0)
    p = onehot / counts
    return jnp.pad(p, ((0, g_pad - num_graphs), (0, n_pad - batch.shape[0])))


def init_params(key, in_channels, hidden_channels, out_channels, num_classes):
    ks = jax.random.split(key, 6)

    def glorot(k, fi, fo):                       # PyG GCNConv: glorot W, zero bias
        bound = jnp.sqrt(6.0 / (fi + fo))
        return jax.random.uniform(k, (fi, fo), jnp.float32, -bound, bound)

    def linear(kw, kb, fi, fo):                  # torch.nn.Linear init
        bound = 1.0 / jnp.sqrt(fi)
        w = jax.random.uniform(kw, (fi, fo), jnp.float32, -bound, bound)
        b = jax.random.uniform(kb, (1, fo), jnp.float32, -bound, bound)
        return w, b

    w1 = glorot(ks[0], in_channels, hidden_channels)
    b1 = jnp.zeros((1, hidden_channels), jnp.float32)
    w2 = glorot(ks[1], hidden_channels, out_channels)
    b2 = jnp.zeros((1, out_channels), jnp.float32)
    lw1, lb1 = linear(ks[2], ks[3], out_channels, 32)
    lw2, lb2 = linear(ks[4], ks[5], 32, num_classes)
    return dict(w1=w1, b1=b1, w2=w2, b2=b2, lw1=lw1, lb1=lb1, lw2=lw2, lb2=lb2)


def simple_gcn_forward(params, x, edge_index, edge_attr, batch, num_graphs,
                       drop_key, *, tile=256):
    n = x.shape[0]
    num_classes = params["lw2"].shape[1]
    g_pad = _round_up(max(num_graphs, SUBLANE), SUBLANE)

    # Fused vs tiled: estimate the fused working set (2x A for buffering + f32
    # intermediates) against a budget that leaves headroom even on v7x's 32 MiB
    # scoped VMEM.
    n_fused = _round_up(n, SUBLANE)
    fused_bytes = (2 * n_fused * n_fused * 2          # A bf16, buffered
                   + 6 * n_fused * LANE * 4           # XW1 + f32 intermediates
                   + 6 * LANE * LANE * 4)             # weights
    use_fused = fused_bytes <= VMEM_BUDGET_BYTES

    n_pad = n_fused if use_fused else _round_up(n, tile)

    # --- graph-structure prep (plain JAX; zero-padding keeps the math exact) ---
    a = _pad_2d(normalized_adjacency(edge_index, edge_attr, n), n_pad, n_pad)
    pool = pooling_matrix(batch, num_graphs, g_pad, n_pad)

    # Layer-1 X @ W1 with the real cin contraction (unpadded) in XLA; only the
    # (N, hidden) result is padded to 128 lanes and fed to the kernels.
    xw1 = jnp.dot(x.astype(jnp.float32), params["w1"])
    xw1 = _pad_2d(xw1, n_pad, LANE).astype(jnp.bfloat16)

    b1 = _pad_2d(params["b1"], 1, LANE)
    w2 = _pad_2d(params["w2"], LANE, LANE).astype(jnp.bfloat16)
    b2 = _pad_2d(params["b2"], 1, LANE)
    lw1 = _pad_2d(params["lw1"], LANE, LANE)
    lb1 = _pad_2d(params["lb1"], 1, LANE)
    lw2 = _pad_2d(params["lw2"], LANE, LANE)
    lb2 = _pad_2d(params["lb2"], 1, LANE)

    # F.dropout(p=0.5) default training=True semantics: keep w.p. 0.5, scale by 2.
    keep = jax.random.bernoulli(drop_key, 0.5, (g_pad, LANE)).astype(jnp.float32)
    drop_scale = keep * 2.0

    if use_fused:
        out = fused_gcn(a, xw1, b1, w2, b2, pool,
                        lw1, lb1, drop_scale, lw2, lb2)
    else:
        # Two-pass tiled path: A tiles are 256-wide (fills the v6e/v7x MXU), the
        # row axis is "parallel", and per-layer feature transforms are hoisted.
        h1 = gcn_agg(a, xw1, b1, apply_relu=True, tile=tile,
                     out_dtype=jnp.bfloat16)                           # conv1+ReLU
        hw2 = rows_matmul(h1, w2, tile=tile, out_dtype=jnp.bfloat16)   # H1 @ W2
        h2 = gcn_agg(a, hw2, b2, apply_relu=False, tile=tile,
                     out_dtype=jnp.float32)                            # conv2
        out = pool_head(pool, h2, lw1, lb1, drop_scale, lw2, lb2, tile=tile)

    return out[:num_graphs, :num_classes]


# ------------------------------- main ----------------------------------------

if __name__ == "__main__":
    key = jax.random.PRNGKey(0)
    k_param, k_x, k_w, k_drop = jax.random.split(key, 4)

    in_channels, hidden_channels, out_channels, num_classes = 4, 32, 16, 8
    nodes_per_graph, num_graphs = 128, 2          # N = 256
    num_nodes = nodes_per_graph * num_graphs

    params = init_params(k_param, in_channels, hidden_channels, out_channels,
                         num_classes)

    # Node features.
    x = jax.random.normal(k_x, (num_nodes, in_channels), jnp.float32)

    # Two ring graphs (edges stay within each graph), directed both ways.
    srcs, dsts = [], []
    for g in range(num_graphs):
        base = g * nodes_per_graph
        for i in range(nodes_per_graph):
            u = base + i
            v = base + (i + 1) % nodes_per_graph
            srcs += [u, v]
            dsts += [v, u]
    edge_index = jnp.array([srcs, dsts], dtype=jnp.int32)
    edge_attr = jax.random.uniform(k_w, (edge_index.shape[1],), jnp.float32, 0.1, 1.0)
    batch = jnp.repeat(jnp.arange(num_graphs, dtype=jnp.int32), nodes_per_graph)

    out = simple_gcn_forward(params, x, edge_index, edge_attr, batch,
                             num_graphs, k_drop)
    out = jax.block_until_ready(out)
    assert out.shape == (num_graphs, num_classes)
    print("KERNEL_OK")
</pallas_src>

<mosaic_0001>
module attributes {stable_mosaic.version = 11 : i64} {
  func.func @fused_gcn_kernel(%arg0: i32, %arg1: memref<256x256xbf16, #tpu.memory_space<vmem>>, %arg2: memref<256x128xbf16, #tpu.memory_space<vmem>>, %arg3: memref<1x128xf32, #tpu.memory_space<vmem>>, %arg4: memref<128x128xbf16, #tpu.memory_space<vmem>>, %arg5: memref<1x128xf32, #tpu.memory_space<vmem>>, %arg6: memref<8x256xf32, #tpu.memory_space<vmem>>, %arg7: memref<128x128xf32, #tpu.memory_space<vmem>>, %arg8: memref<1x128xf32, #tpu.memory_space<vmem>>, %arg9: memref<8x128xf32, #tpu.memory_space<vmem>>, %arg10: memref<128x128xf32, #tpu.memory_space<vmem>>, %arg11: memref<1x128xf32, #tpu.memory_space<vmem>>, %arg12: memref<8x128xf32, #tpu.memory_space<vmem>>) attributes {dimension_semantics = [#tpu.dimension_semantics<arbitrary>], iteration_bounds = array<i64: 1>, scalar_prefetch = 0 : i64, scratch_operands = 0 : i64, tpu.core_type = #tpu.core_type<tc>, window_params = [{pipeline_mode = #tpu.pipeline_mode<synchronous>, transform_indices = @transform_0, window_bounds = array<i64: 256, 256>}, {pipeline_mode = #tpu.pipeline_mode<synchronous>, transform_indices = @transform_1, window_bounds = array<i64: 256, 128>}, {pipeline_mode = #tpu.pipeline_mode<synchronous>, transform_indices = @transform_2, window_bounds = array<i64: 1, 128>}, {pipeline_mode = #tpu.pipeline_mode<synchronous>, transform_indices = @transform_3, window_bounds = array<i64: 128, 128>}, {pipeline_mode = #tpu.pipeline_mode<synchronous>, transform_indices = @transform_4, window_bounds = array<i64: 1, 128>}, {pipeline_mode = #tpu.pipeline_mode<synchronous>, transform_indices = @transform_5, window_bounds = array<i64: 8, 256>}, {pipeline_mode = #tpu.pipeline_mode<synchronous>, transform_indices = @transform_6, window_bounds = array<i64: 128, 128>}, {pipeline_mode = #tpu.pipeline_mode<synchronous>, transform_indices = @transform_7, window_bounds = array<i64: 1, 128>}, {pipeline_mode = #tpu.pipeline_mode<synchronous>, transform_indices = @transform_8, window_bounds = array<i64: 8, 128>}, {pipeline_mode = #tpu.pipeline_mode<synchronous>, transform_indices = @transform_9, window_bounds = array<i64: 128, 128>}, {pipeline_mode = #tpu.pipeline_mode<synchronous>, transform_indices = @transform_10, window_bounds = array<i64: 1, 128>}, {pipeline_mode = #tpu.pipeline_mode<synchronous>, transform_indices = @transform_11, window_bounds = array<i64: 8, 128>}]} {
    %c0 = arith.constant 0 : index
    %c0_0 = arith.constant 0 : index
    %0 = vector.load %arg1[%c0, %c0_0] : memref<256x256xbf16, #tpu.memory_space<vmem>>, vector<256x256xbf16>
    %c0_1 = arith.constant 0 : index
    %c0_2 = arith.constant 0 : index
    %1 = vector.load %arg2[%c0_1, %c0_2] : memref<256x128xbf16, #tpu.memory_space<vmem>>, vector<256x128xbf16>
    %cst = arith.constant dense<0.000000e+00> : vector<256x128xf32>
    %2 = tpu.matmul %0, %1, %cst {dimension_numbers = #tpu.dot_dimension_numbers<[1], [0], [0], [1], [0, 0, 1, 1], [], []>} : vector<256x256xbf16>, vector<256x128xbf16>, vector<256x128xf32> -> vector<256x128xf32>
    %c0_3 = arith.constant 0 : index
    %c0_4 = arith.constant 0 : index
    %3 = vector.load %arg3[%c0_3, %c0_4] : memref<1x128xf32, #tpu.memory_space<vmem>>, vector<1x128xf32>
    %4 = vector.broadcast %3 : vector<1x128xf32> to vector<256x128xf32>
    %5 = arith.addf %2, %4 : vector<256x128xf32>
    %cst_5 = arith.constant 0.000000e+00 : f32
    %6 = vector.broadcast %cst_5 : f32 to vector<256x128xf32>
    %7 = arith.maximumf %5, %6 : vector<256x128xf32>
    %8 = arith.truncf %7 : vector<256x128xf32> to vector<256x128xbf16>
    %c0_6 = arith.constant 0 : index
    %c0_7 = arith.constant 0 : index
    %9 = vector.load %arg4[%c0_6, %c0_7] : memref<128x128xbf16, #tpu.memory_space<vmem>>, vector<128x128xbf16>
    %cst_8 = arith.constant dense<0.000000e+00> : vector<256x128xf32>
    %10 = tpu.matmul %8, %9, %cst_8 {dimension_numbers = #tpu.dot_dimension_numbers<[1], [0], [0], [1], [0, 0, 1, 1], [], []>} : vector<256x128xbf16>, vector<128x128xbf16>, vector<256x128xf32> -> vector<256x128xf32>
    %11 = arith.truncf %10 : vector<256x128xf32> to vector<256x128xbf16>
    %cst_9 = arith.constant dense<0.000000e+00> : vector<256x128xf32>
    %12 = tpu.matmul %0, %11, %cst_9 {dimension_numbers = #tpu.dot_dimension_numbers<[1], [0], [0], [1], [0, 0, 1, 1], [], []>} : vector<256x256xbf16>, vector<256x128xbf16>, vector<256x128xf32> -> vector<256x128xf32>
    %c0_10 = arith.constant 0 : index
    %c0_11 = arith.constant 0 : index
    %13 = vector.load %arg5[%c0_10, %c0_11] : memref<1x128xf32, #tpu.memory_space<vmem>>, vector<1x128xf32>
    %14 = vector.broadcast %13 : vector<1x128xf32> to vector<256x128xf32>
    %15 = arith.addf %12, %14 : vector<256x128xf32>
    %c0_12 = arith.constant 0 : index
    %c0_13 = arith.constant 0 : index
    %16 = vector.load %arg6[%c0_12, %c0_13] : memref<8x256xf32, #tpu.memory_space<vmem>>, vector<8x256xf32>
    %cst_14 = arith.constant dense<0.000000e+00> : vector<8x128xf32>
    %17 = tpu.matmul %16, %15, %cst_14 {dimension_numbers = #tpu.dot_dimension_numbers<[1], [0], [0], [1], [0, 0, 1, 1], [], []>} : vector<8x256xf32>, vector<256x128xf32>, vector<8x128xf32> -> vector<8x128xf32>
    %c0_15 = arith.constant 0 : index
    %c0_16 = arith.constant 0 : index
    %18 = vector.load %arg7[%c0_15, %c0_16] : memref<128x128xf32, #tpu.memory_space<vmem>>, vector<128x128xf32>
    %cst_17 = arith.constant dense<0.000000e+00> : vector<8x128xf32>
    %19 = tpu.matmul %17, %18, %cst_17 {dimension_numbers = #tpu.dot_dimension_numbers<[1], [0], [0], [1], [0, 0, 1, 1], [], []>} : vector<8x128xf32>, vector<128x128xf32>, vector<8x128xf32> -> vector<8x128xf32>
    %c0_18 = arith.constant 0 : index
    %c0_19 = arith.constant 0 : index
    %20 = vector.load %arg8[%c0_18, %c0_19] : memref<1x128xf32, #tpu.memory_space<vmem>>, vector<1x128xf32>
    %21 = vector.broadcast %20 : vector<1x128xf32> to vector<8x128xf32>
    %22 = arith.addf %19, %21 : vector<8x128xf32>
    %c0_20 = arith.constant 0 : index
    %c0_21 = arith.constant 0 : index
    %23 = vector.load %arg9[%c0_20, %c0_21] : memref<8x128xf32, #tpu.memory_space<vmem>>, vector<8x128xf32>
    %24 = arith.mulf %22, %23 : vector<8x128xf32>
    %c0_22 = arith.constant 0 : index
    %c0_23 = arith.constant 0 : index
    %25 = vector.load %arg10[%c0_22, %c0_23] : memref<128x128xf32, #tpu.memory_space<vmem>>, vector<128x128xf32>
    %cst_24 = arith.constant dense<0.000000e+00> : vector<8x128xf32>
    %26 = tpu.matmul %24, %25, %cst_24 {dimension_numbers = #tpu.dot_dimension_numbers<[1], [0], [0], [1], [0, 0, 1, 1], [], []>} : vector<8x128xf32>, vector<128x128xf32>, vector<8x128xf32> -> vector<8x128xf32>
    %c0_25 = arith.constant 0 : index
    %c0_26 = arith.constant 0 : index
    %27 = vector.load %arg11[%c0_25, %c0_26] : memref<1x128xf32, #tpu.memory_space<vmem>>, vector<1x128xf32>
    %28 = vector.broadcast %27 : vector<1x128xf32> to vector<8x128xf32>
    %29 = arith.addf %26, %28 : vector<8x128xf32>
    %c0_27 = arith.constant 0 : index
    %c0_28 = arith.constant 0 : index
    %30 = vector.load %arg12[%c0_27, %c0_28] : memref<8x128xf32, #tpu.memory_space<vmem>>, vector<8x128xf32>
    tpu.vector_store %arg12[%c0_27, %c0_28], %29 {strides = array<i32>} : memref<8x128xf32, #tpu.memory_space<vmem>>, vector<8x128xf32>,
    return
  }
  func.func @transform_0(%arg0: i32) -> (i32, i32) {
    %c0_i32 = arith.constant 0 : i32
    %c0_i32_0 = arith.constant 0 : i32
    %c0_i32_1 = arith.constant 0 : i32
    return %c0_i32, %c0_i32_0 : i32, i32
  }
  func.func @transform_1(%arg0: i32) -> (i32, i32) {
    %c0_i32 = arith.constant 0 : i32
    %c0_i32_0 = arith.constant 0 : i32
    %c0_i32_1 = arith.constant 0 : i32
    return %c0_i32, %c0_i32_0 : i32, i32
  }
  func.func @transform_2(%arg0: i32) -> (i32, i32) {
    %c0_i32 = arith.constant 0 : i32
    %c0_i32_0 = arith.constant 0 : i32
    %c0_i32_1 = arith.constant 0 : i32
    return %c0_i32, %c0_i32_0 : i32, i32
  }
  func.func @transform_3(%arg0: i32) -> (i32, i32) {
    %c0_i32 = arith.constant 0 : i32
    %c0_i32_0 = arith.constant 0 : i32
    %c0_i32_1 = arith.constant 0 : i32
    return %c0_i32, %c0_i32_0 : i32, i32
  }
  func.func @transform_4(%arg0: i32) -> (i32, i32) {
    %c0_i32 = arith.constant 0 : i32
    %c0_i32_0 = arith.constant 0 : i32
    %c0_i32_1 = arith.constant 0 : i32
    return %c0_i32, %c0_i32_0 : i32, i32
  }
  func.func @transform_5(%arg0: i32) -> (i32, i32) {
    %c0_i32 = arith.constant 0 : i32
    %c0_i32_0 = arith.constant 0 : i32
    %c0_i32_1 = arith.constant 0 : i32
    return %c0_i32, %c0_i32_0 : i32, i32
  }
  func.func @transform_6(%arg0: i32) -> (i32, i32) {
    %c0_i32 = arith.constant 0 : i32
    %c0_i32_0 = arith.constant 0 : i32
    %c0_i32_1 = arith.constant 0 : i32
    return %c0_i32, %c0_i32_0 : i32, i32
  }
  func.func @transform_7(%arg0: i32) -> (i32, i32) {
    %c0_i32 = arith.constant 0 : i32
    %c0_i32_0 = arith.constant 0 : i32
    %c0_i32_1 = arith.constant 0 : i32
    return %c0_i32, %c0_i32_0 : i32, i32
  }
  func.func @transform_8(%arg0: i32) -> (i32, i32) {
    %c0_i32 = arith.constant 0 : i32
    %c0_i32_0 = arith.constant 0 : i32
    %c0_i32_1 = arith.constant 0 : i32
    return %c0_i32, %c0_i32_0 : i32, i32
  }
  func.func @transform_9(%arg0: i32) -> (i32, i32) {
    %c0_i32 = arith.constant 0 : i32
    %c0_i32_0 = arith.constant 0 : i32
    %c0_i32_1 = arith.constant 0 : i32
    return %c0_i32, %c0_i32_0 : i32, i32
  }
  func.func @transform_10(%arg0: i32) -> (i32, i32) {
    %c0_i32 = arith.constant 0 : i32
    %c0_i32_0 = arith.constant 0 : i32
    %c0_i32_1 = arith.constant 0 : i32
    return %c0_i32, %c0_i32_0 : i32, i32
  }
  func.func @transform_11(%arg0: i32) -> (i32, i32) {
    %c0_i32 = arith.constant 0 : i32
    %c0_i32_0 = arith.constant 0 : i32
    %c0_i32_1 = arith.constant 0 : i32
    return %c0_i32, %c0_i32_0 : i32, i32
  }
}

</mosaic_0001>

<llo_original>
// kernel: tpu_custom_call.1
$region0: #{tpu_custom_call.1}
  #allocation0 [shape = 'u32[]', space=smem, size = 0x4, offset = 0x4, fixed_abs, tag = 'smem constant byte address 0x4 - core index']
  #allocation1 [shape = 'u32[144,128]{1,0:T(1,128)}', space=vmem, size = 0x12000, scoped, tag = 'internal scratch']
  %s0 = inlined_call_operand.hbm [shape: bf16[256,256], index: 0, kind: input, shape index: {}]
  %s1 = inlined_call_operand.hbm [shape: bf16[256,128], index: 1, kind: input, shape index: {}]
  %s2 = inlined_call_operand.vmem [shape: f32[1,128], index: 2, kind: input, shape index: {}]
  %s3 = inlined_call_operand.hbm [shape: bf16[128,128], index: 3, kind: input, shape index: {}]
  %s4 = inlined_call_operand.vmem [shape: f32[1,128], index: 4, kind: input, shape index: {}]
  %s5 = inlined_call_operand.hbm [shape: f32[8,256], index: 5, kind: input, shape index: {}]
  %s6 = inlined_call_operand.hbm [shape: f32[128,128], index: 6, kind: input, shape index: {}]
  %s7 = inlined_call_operand.vmem [shape: f32[1,128], index: 7, kind: input, shape index: {}]
  %s8 = inlined_call_operand.vmem [shape: f32[8,128], index: 8, kind: input, shape index: {}]
  %s9 = inlined_call_operand.hbm [shape: f32[128,128], index: 9, kind: input, shape index: {}]
  %s10 = inlined_call_operand.vmem [shape: f32[1,128], index: 10, kind: input, shape index: {}]
  %s11 = inlined_call_operand.hbm [shape: f32[8,128], index: 11, kind: output, shape index: {}]
  %s12 = sld [smem:[#allocation0]]
  $region78: #{tpu_custom_call.1} parent=0
    _
  %s14 = ssub.s32 1, %s12
  %s15 = scalar_select 0, %s14, %s12
  $region1: #{tpu_custom_call.1} parent=0
    #allocation2 [shape = 'u8[131072]{0}', space=vmem, size = 0x20000, scoped, tag = 'input window, operand 0, single buffered']
    #allocation3 [shape = 's32[1]{0}', space=sflag, size = 0x4, scoped, tag = 'scoped memory for tpu_custom_call.1']
    #allocation4 [shape = 's32[1]{0}', space=sflag, size = 0x4, scoped, tag = 'scoped memory for tpu_custom_call.1']
    #allocation5 [shape = 'u8[65536]{0}', space=vmem, size = 0x10000, scoped, tag = 'input window, operand 1, single buffered']
    #allocation6 [shape = 's32[1]{0}', space=sflag, size = 0x4, scoped, tag = 'scoped memory for tpu_custom_call.1']
    #allocation7 [shape = 'u8[32768]{0}', space=vmem, size = 0x8000, scoped, tag = 'input window, operand 3, single buffered']
    #allocation8 [shape = 'u8[8192]{0}', space=vmem, size = 0x2000, scoped, tag = 'input window, operand 5, single buffered']
    #allocation9 [shape = 's32[1]{0}', space=sflag, size = 0x4, scoped, tag = 'scoped memory for tpu_custom_call.1']
    #allocation10 [shape = 'u8[65536]{0}', space=vmem, size = 0x10000, scoped, tag = 'input window, operand 6, single buffered']
    #allocation11 [shape = 'u8[65536]{0}', space=vmem, size = 0x10000, scoped, tag = 'input window, operand 9, single buffered']
    #allocation12 [shape = 's32[1]{0}', space=sflag, size = 0x4, scoped, tag = 'scoped memory for tpu_custom_call.1']
    #allocation13 [shape = 'u8[4096]{0}', space=vmem, size = 0x1000, scoped, tag = 'output window, operand 0, single buffered']
    %16 = vsyncpa [#allocation3], 0
    %17 = vsyncpa [#allocation6], 0
    %18 = vsyncpa [#allocation9], 0
    %19 = vsyncpa [#allocation12], 0
    %20 = vsyncpa [#allocation4], 0
    // Predicated region
    $region2: #{tpu_custom_call.1} parent=1 // pred_check
      _
    $region3: #{tpu_custom_call.1} parent=1 // pred_check_branch
      %22 = sbr.rel (0) target = $region5
    $region4: #{tpu_custom_call.1} parent=1 // pred_region
      %s24 = ssub.s32 4096, 4096
      %25 = vsyncadd [#allocation3], %s24
      %s26 = sshll.u32 [#allocation2], 4
      %s27 = int_to_ptr.vmem [resolvable:$true] %s26
      %32 = dma.hbm_to_vmem [thread:$0]  %s0, 4096, %s27, [#allocation3], 128, 128, 8
    $region5: #{tpu_custom_call.1} parent=1 // pred_fallthru
      _
    // Predicated region
    $region6: #{tpu_custom_call.1} parent=1 // pred_check
      _
    $region7: #{tpu_custom_call.1} parent=1 // pred_check_branch
      %34 = sbr.rel (0) target = $region9
    $region8: #{tpu_custom_call.1} parent=1 // pred_region
      %s36 = ssub.s32 2048, 2048
      %37 = vsyncadd [#allocation6], %s36
      %s38 = sshll.u32 [#allocation5], 4
      %s39 = int_to_ptr.vmem [resolvable:$true] %s38
      %44 = dma.hbm_to_vmem [thread:$0]  %s1, 2048, %s39, [#allocation6], 64, 64, 4
    $region9: #{tpu_custom_call.1} parent=1 // pred_fallthru
      _
    // Predicated region
    $region10: #{tpu_custom_call.1} parent=1 // pred_check
      _
    $region11: #{tpu_custom_call.1} parent=1 // pred_check_branch
      %46 = sbr.rel (0) target = $region13
    $region12: #{tpu_custom_call.1} parent=1 // pred_region
      _
    $region13: #{tpu_custom_call.1} parent=1 // pred_fallthru
      _
    // Predicated region
    $region14: #{tpu_custom_call.1} parent=1 // pred_check
      _
    $region15: #{tpu_custom_call.1} parent=1 // pred_check_branch
      %48 = sbr.rel (0) target = $region17
    $region16: #{tpu_custom_call.1} parent=1 // pred_region
      %s50 = ssub.s32 1024, 1024
      %51 = vsyncadd [#allocation6], %s50
      %s52 = sshll.u32 [#allocation7], 4
      %s53 = int_to_ptr.vmem [resolvable:$true] %s52
      %58 = dma.hbm_to_vmem [thread:$0]  %s3, 1024, %s53, [#allocation6], 64, 64, 4
    $region17: #{tpu_custom_call.1} parent=1 // pred_fallthru
      _
    // Predicated region
    $region18: #{tpu_custom_call.1} parent=1 // pred_check
      _
    $region19: #{tpu_custom_call.1} parent=1 // pred_check_branch
      %60 = sbr.rel (0) target = $region21
    $region20: #{tpu_custom_call.1} parent=1 // pred_region
      _
    $region21: #{tpu_custom_call.1} parent=1 // pred_fallthru
      _
    // Predicated region
    $region22: #{tpu_custom_call.1} parent=1 // pred_check
      _
    $region23: #{tpu_custom_call.1} parent=1 // pred_check_branch
      %62 = sbr.rel (0) target = $region25
    $region24: #{tpu_custom_call.1} parent=1 // pred_region
      %s64 = ssub.s32 256, 256
      %65 = vsyncadd [#allocation9], %s64
      %s67 = sshll.u32 [#allocation8], 4
      %s68 = int_to_ptr.vmem [resolvable:$true] %s67
      %70 = dma.hbm_to_vmem [thread:$0]  %s5, 256, %s68, [#allocation9]
    $region25: #{tpu_custom_call.1} parent=1 // pred_fallthru
      _
    // Predicated region
    $region26: #{tpu_custom_call.1} parent=1 // pred_check
      _
    $region27: #{tpu_custom_call.1} parent=1 // pred_check_branch
      %72 = sbr.rel (0) target = $region29
    $region28: #{tpu_custom_call.1} parent=1 // pred_region
      %s74 = ssub.s32 2048, 2048
      %75 = vsyncadd [#allocation9], %s74
      %s76 = sshll.u32 [#allocation10], 4
      %s77 = int_to_ptr.vmem [resolvable:$true] %s76
      %82 = dma.hbm_to_vmem [thread:$0]  %s6, 2048, %s77, [#allocation9], 128, 128, 8
    $region29: #{tpu_custom_call.1} parent=1 // pred_fallthru
      _
    // Predicated region
    $region30: #{tpu_custom_call.1} parent=1 // pred_check
      _
    $region31: #{tpu_custom_call.1} parent=1 // pred_check_branch
      %84 = sbr.rel (0) target = $region33
    $region32: #{tpu_custom_call.1} parent=1 // pred_region
      _
    $region33: #{tpu_custom_call.1} parent=1 // pred_fallthru
      _
    // Predicated region
    $region34: #{tpu_custom_call.1} parent=1 // pred_check
      _
    $region35: #{tpu_custom_call.1} parent=1 // pred_check_branch
      %86 = sbr.rel (0) target = $region37
    $region36: #{tpu_custom_call.1} parent=1 // pred_region
      _
    $region37: #{tpu_custom_call.1} parent=1 // pred_fallthru
      _
    // Predicated region
    $region38: #{tpu_custom_call.1} parent=1 // pred_check
      _
    $region39: #{tpu_custom_call.1} parent=1 // pred_check_branch
      %88 = sbr.rel (0) target = $region41
    $region40: #{tpu_custom_call.1} parent=1 // pred_region
      %s90 = ssub.s32 2048, 2048
      %91 = vsyncadd [#allocation12], %s90
      %s92 = sshll.u32 [#allocation11], 4
      %s93 = int_to_ptr.vmem [resolvable:$true] %s92
      %98 = dma.hbm_to_vmem [thread:$0]  %s9, 2048, %s93, [#allocation12], 128, 128, 8
    $region41: #{tpu_custom_call.1} parent=1 // pred_fallthru
      _
    // Predicated region
    $region42: #{tpu_custom_call.1} parent=1 // pred_check
      _
    $region43: #{tpu_custom_call.1} parent=1 // pred_check_branch
      %100 = sbr.rel (0) target = $region45
    $region44: #{tpu_custom_call.1} parent=1 // pred_region
      _
    $region45: #{tpu_custom_call.1} parent=1 // pred_fallthru
      _
    // Predicated region
    $region46: #{tpu_custom_call.1} parent=1 // pred_check
      _
    $region47: #{tpu_custom_call.1} parent=1 // pred_check_branch
      %102 = sbr.rel (0) target = $region49
    $region48: #{tpu_custom_call.1} parent=1 // pred_region
      %103 = dma.done [#allocation3], 4096
    $region49: #{tpu_custom_call.1} parent=1 // pred_fallthru
      _
    // Predicated region
    $region50: #{tpu_custom_call.1} parent=1 // pred_check
      _
    $region51: #{tpu_custom_call.1} parent=1 // pred_check_branch
      %105 = sbr.rel (0) target = $region53
    $region52: #{tpu_custom_call.1} parent=1 // pred_region
      %106 = dma.done [#allocation6], 2048
    $region53: #{tpu_custom_call.1} parent=1 // pred_fallthru
      _
    // Predicated region
    $region54: #{tpu_custom_call.1} parent=1 // pred_check
      _
    $region55: #{tpu_custom_call.1} parent=1 // pred_check_branch
      %108 = sbr.rel (0) target = $region57
    $region56: #{tpu_custom_call.1} parent=1 // pred_region
      %109 = dma.done [#allocation6], 1024
    $region57: #{tpu_custom_call.1} parent=1 // pred_fallthru
      _
    // Predicated region
    $region58: #{tpu_custom_call.1} parent=1 // pred_check
      _
    $region59: #{tpu_custom_call.1} parent=1 // pred_check_branch
      %111 = sbr.rel (0) target = $region61
    $region60: #{tpu_custom_call.1} parent=1 // pred_region
      %112 = dma.done [#allocation9], 256
    $region61: #{tpu_custom_call.1} parent=1 // pred_fallthru
      _
    // Predicated region
    $region62: #{tpu_custom_call.1} parent=1 // pred_check
      _
    $region63: #{tpu_custom_call.1} parent=1 // pred_check_branch
      %114 = sbr.rel (0) target = $region65
    $region64: #{tpu_custom_call.1} parent=1 // pred_region
      %115 = dma.done [#allocation9], 2048
    $region65: #{tpu_custom_call.1} parent=1 // pred_fallthru
      _
    // Predicated region
    $region66: #{tpu_custom_call.1} parent=1 // pred_check
      _
    $region67: #{tpu_custom_call.1} parent=1 // pred_check_branch
      %117 = sbr.rel (0) target = $region69
    $region68: #{tpu_custom_call.1} parent=1 // pred_region
      %118 = dma.done [#allocation12], 2048
    $region69: #{tpu_custom_call.1} parent=1 // pred_fallthru
      _
    %v120 = vld [vmem:[#allocation2] sm:$0xff]
    %v121 = vld [vmem:[#allocation2 + $0x8] sm:$0xff]
    %v122 = vld [vmem:[#allocation2 + $0x10] sm:$0xff]
    %v123 = vld [vmem:[#allocation2 + $0x18] sm:$0xff]
    %v124 = vld [vmem:[#allocation2 + $0x20] sm:$0xff]
    %v125 = vld [vmem:[#allocation2 + $0x28] sm:$0xff]
    %v126 = vld [vmem:[#allocation2 + $0x30] sm:$0xff]
    %v127 = vld [vmem:[#allocation2 + $0x38] sm:$0xff]
    %v128 = vld [vmem:[#allocation2 + $0x40] sm:$0xff]
    %v129 = vld [vmem:[#allocation2 + $0x48] sm:$0xff]
    %v130 = vld [vmem:[#allocation2 + $0x50] sm:$0xff]
    %v131 = vld [vmem:[#allocation2 + $0x58] sm:$0xff]
    %v132 = vld [vmem:[#allocation2 + $0x60] sm:$0xff]
    %v133 = vld [vmem:[#allocation2 + $0x68] sm:$0xff]
    %v134 = vld [vmem:[#allocation2 + $0x70] sm:$0xff]
    %v135 = vld [vmem:[#allocation2 + $0x78] sm:$0xff]
    %v136 = vld [vmem:[#allocation2 + $0x80] sm:$0xff]
    %v137 = vld [vmem:[#allocation2 + $0x88] sm:$0xff]
    %v138 = vld [vmem:[#allocation2 + $0x90] sm:$0xff]
    %v139 = vld [vmem:[#allocation2 + $0x98] sm:$0xff]
    %v140 = vld [vmem:[#allocation2 + $0xa0] sm:$0xff]
    %v141 = vld [vmem:[#allocation2 + $0xa8] sm:$0xff]
    %v142 = vld [vmem:[#allocation2 + $0xb0] sm:$0xff]
    %v143 = vld [vmem:[#allocation2 + $0xb8] sm:$0xff]
    %v144 = vld [vmem:[#allocation2 + $0xc0] sm:$0xff]
    %v145 = vld [vmem:[#allocation2 + $0xc8] sm:$0xff]
    %v146 = vld [vmem:[#allocation2 + $0xd0] sm:$0xff]
    %v147 = vld [vmem:[#allocation2 + $0xd8] sm:$0xff]
    %v148 = vld [vmem:[#allocation2 + $0xe0] sm:$0xff]
    %v149 = vld [vmem:[#allocation2 + $0xe8] sm:$0xff]
    %v150 = vld [vmem:[#allocation2 + $0xf0] sm:$0xff]
    %v151 = vld [vmem:[#allocation2 + $0xf8] sm:$0xff]
    %v152 = vld [vmem:[#allocation5] sm:$0xf]
    %v153 = vld [vmem:[#allocation5 + $0x4] sm:$0xf]
    %v154 = vld [vmem:[#allocation5 + $0x8] sm:$0xf]
    %v155 = vld [vmem:[#allocation5 + $0xc] sm:$0xf]
    %v156 = vld [vmem:[#allocation5 + $0x10] sm:$0xf]
    %v157 = vld [vmem:[#allocation5 + $0x14] sm:$0xf]
    %v158 = vld [vmem:[#allocation5 + $0x18] sm:$0xf]
    %v159 = vld [vmem:[#allocation5 + $0x1c] sm:$0xf]
    %v160 = vld [vmem:[#allocation5 + $0x20] sm:$0xf]
    %v161 = vld [vmem:[#allocation5 + $0x24] sm:$0xf]
    %v162 = vld [vmem:[#allocation5 + $0x28] sm:$0xf]
    %v163 = vld [vmem:[#allocation5 + $0x2c] sm:$0xf]
    %v164 = vld [vmem:[#allocation5 + $0x30] sm:$0xf]
    %v165 = vld [vmem:[#allocation5 + $0x34] sm:$0xf]
    %v166 = vld [vmem:[#allocation5 + $0x38] sm:$0xf]
    %v167 = vld [vmem:[#allocation5 + $0x3c] sm:$0xf]
    %v168 = vld [vmem:[#allocation5 + $0x40] sm:$0xf]
    %v169 = vld [vmem:[#allocation5 + $0x44] sm:$0xf]
    %v170 = vld [vmem:[#allocation5 + $0x48] sm:$0xf]
    %v171 = vld [vmem:[#allocation5 + $0x4c] sm:$0xf]
    %v172 = vld [vmem:[#allocation5 + $0x50] sm:$0xf]
    %v173 = vld [vmem:[#allocation5 + $0x54] sm:$0xf]
    %v174 = vld [vmem:[#allocation5 + $0x58] sm:$0xf]
    %v175 = vld [vmem:[#allocation5 + $0x5c] sm:$0xf]
    %v176 = vld [vmem:[#allocation5 + $0x60] sm:$0xf]
    %v177 = vld [vmem:[#allocation5 + $0x64] sm:$0xf]
    %v178 = vld [vmem:[#allocation5 + $0x68] sm:$0xf]
    %v179 = vld [vmem:[#allocation5 + $0x6c] sm:$0xf]
    %v180 = vld [vmem:[#allocation5 + $0x70] sm:$0xf]
    %v181 = vld [vmem:[#allocation5 + $0x74] sm:$0xf]
    %v182 = vld [vmem:[#allocation5 + $0x78] sm:$0xf]
    %v183 = vld [vmem:[#allocation5 + $0x7c] sm:$0xf]
    %v184 = vld [vmem:[%s2] sm:$0x1]
    %v186 = vlaneseq
    %v187 = vshrl.u32 %v186, 7
    %v188 = vsub.s32 0, %v187
    %v189 = vrot.slane %v184, %v188
    %v223 = vunpack.c.l.b16 %v120
    %v224 = vunpack.c.h.b16 %v120
    %v225 = vunpack.c.l.b16 %v121
    %v226 = vunpack.c.h.b16 %v121
    %v227 = vunpack.c.l.b16 %v122
    %v228 = vunpack.c.h.b16 %v122
    %v229 = vunpack.c.l.b16 %v123
    %v230 = vunpack.c.h.b16 %v123
    %v231 = vunpack.c.l.b16 %v124
    %v232 = vunpack.c.h.b16 %v124
    %v233 = vunpack.c.l.b16 %v125
    %v234 = vunpack.c.h.b16 %v125
    %v235 = vunpack.c.l.b16 %v126
    %v236 = vunpack.c.h.b16 %v126
    %v237 = vunpack.c.l.b16 %v127
    %v238 = vunpack.c.h.b16 %v127
    %v239 = vunpack.c.l.b16 %v128
    %v240 = vunpack.c.h.b16 %v128
    %v241 = vunpack.c.l.b16 %v129
    %v242 = vunpack.c.h.b16 %v129
    %v243 = vunpack.c.l.b16 %v130
    %v244 = vunpack.c.h.b16 %v130
    %v245 = vunpack.c.l.b16 %v131
    %v246 = vunpack.c.h.b16 %v131
    %v247 = vunpack.c.l.b16 %v132
    %v248 = vunpack.c.h.b16 %v132
    %v249 = vunpack.c.l.b16 %v133
    %v250 = vunpack.c.h.b16 %v133
    %v251 = vunpack.c.l.b16 %v134
    %v252 = vunpack.c.h.b16 %v134
    %v253 = vunpack.c.l.b16 %v135
    %v254 = vunpack.c.h.b16 %v135
    %v255 = vunpack.c.l.b16 %v136
    %v256 = vunpack.c.h.b16 %v136
    %v257 = vunpack.c.l.b16 %v137
    %v258 = vunpack.c.h.b16 %v137
    %v259 = vunpack.c.l.b16 %v138
    %v260 = vunpack.c.h.b16 %v138
    %v261 = vunpack.c.l.b16 %v139
    %v262 = vunpack.c.h.b16 %v139
    %v263 = vunpack.c.l.b16 %v140
    %v264 = vunpack.c.h.b16 %v140
    %v265 = vunpack.c.l.b16 %v141
    %v266 = vunpack.c.h.b16 %v141
    %v267 = vunpack.c.l.b16 %v142
    %v268 = vunpack.c.h.b16 %v142
    %v269 = vunpack.c.l.b16 %v143
    %v270 = vunpack.c.h.b16 %v143
    %v271 = vunpack.c.l.b16 %v144
    %v272 = vunpack.c.h.b16 %v144
    %v273 = vunpack.c.l.b16 %v145
    %v274 = vunpack.c.h.b16 %v145
    %v275 = vunpack.c.l.b16 %v146
    %v276 = vunpack.c.h.b16 %v146
    %v277 = vunpack.c.l.b16 %v147
    %v278 = vunpack.c.h.b16 %v147
    %v279 = vunpack.c.l.b16 %v148
    %v280 = vunpack.c.h.b16 %v148
    %v281 = vunpack.c.l.b16 %v149
    %v282 = vunpack.c.h.b16 %v149
    %v283 = vunpack.c.l.b16 %v150
    %v284 = vunpack.c.h.b16 %v150
    %v285 = vunpack.c.l.b16 %v151
    %v286 = vunpack.c.h.b16 %v151
    %v287 = vpack.c.b16 %v225, %v223
    %v288 = vpack.c.b16 %v226, %v224
    %v289 = vpack.c.b16 %v229, %v227
    %v290 = vpack.c.b16 %v230, %v228
    %v291 = vpack.c.b16 %v233, %v231
    %v292 = vpack.c.b16 %v234, %v232
    %v293 = vpack.c.b16 %v237, %v235
    %v294 = vpack.c.b16 %v238, %v236
    %v295 = vpack.c.b16 %v241, %v239
    %v296 = vpack.c.b16 %v242, %v240
    %v297 = vpack.c.b16 %v245, %v243
    %v298 = vpack.c.b16 %v246, %v244
    %v299 = vpack.c.b16 %v249, %v247
    %v300 = vpack.c.b16 %v250, %v248
    %v301 = vpack.c.b16 %v253, %v251
    %v302 = vpack.c.b16 %v254, %v252
    %v303 = vpack.c.b16 %v257, %v255
    %v304 = vpack.c.b16 %v258, %v256
    %v305 = vpack.c.b16 %v261, %v259
    %v306 = vpack.c.b16 %v262, %v260
    %v307 = vpack.c.b16 %v265, %v263
    %v308 = vpack.c.b16 %v266, %v264
    %v309 = vpack.c.b16 %v269, %v267
    %v310 = vpack.c.b16 %v270, %v268
    %v311 = vpack.c.b16 %v273, %v271
    %v312 = vpack.c.b16 %v274, %v272
    %v313 = vpack.c.b16 %v277, %v275
    %v314 = vpack.c.b16 %v278, %v276
    %v315 = vpack.c.b16 %v281, %v279
    %v316 = vpack.c.b16 %v282, %v280
    %v317 = vpack.c.b16 %v285, %v283
    %v318 = vpack.c.b16 %v286, %v284
    %v383 = vunpack.c.l.b16 %v152
    %v384 = vunpack.c.l.b16 %v153
    %v385 = vunpack.c.l.b16 %v154
    %v386 = vunpack.c.l.b16 %v155
    %v387 = vunpack.c.l.b16 %v156
    %v388 = vunpack.c.l.b16 %v157
    %v389 = vunpack.c.l.b16 %v158
    %v390 = vunpack.c.l.b16 %v159
    %v391 = vunpack.c.l.b16 %v160
    %v392 = vunpack.c.l.b16 %v161
    %v393 = vunpack.c.l.b16 %v162
    %v394 = vunpack.c.l.b16 %v163
    %v395 = vunpack.c.l.b16 %v164
    %v396 = vunpack.c.l.b16 %v165
    %v397 = vunpack.c.l.b16 %v166
    %v398 = vunpack.c.l.b16 %v167
    %v399 = vunpack.c.l.b16 %v168
    %v400 = vunpack.c.l.b16 %v169
    %v401 = vunpack.c.l.b16 %v170
    %v402 = vunpack.c.l.b16 %v171
    %v403 = vunpack.c.l.b16 %v172
    %v404 = vunpack.c.l.b16 %v173
    %v405 = vunpack.c.l.b16 %v174
    %v406 = vunpack.c.l.b16 %v175
    %v407 = vunpack.c.l.b16 %v176
    %v408 = vunpack.c.l.b16 %v177
    %v409 = vunpack.c.l.b16 %v178
    %v410 = vunpack.c.l.b16 %v179
    %v411 = vunpack.c.l.b16 %v180
    %v412 = vunpack.c.l.b16 %v181
    %v413 = vunpack.c.l.b16 %v182
    %v414 = vunpack.c.l.b16 %v183
    %v415 = vpack.c.b16 %v384, %v383
    %v416 = vpack.c.b16 %v386, %v385
    %v417 = vpack.c.b16 %v388, %v387
    %v418 = vpack.c.b16 %v390, %v389
    %v419 = vpack.c.b16 %v392, %v391
    %v420 = vpack.c.b16 %v394, %v393
    %v421 = vpack.c.b16 %v396, %v395
    %v422 = vpack.c.b16 %v398, %v397
    %v423 = vpack.c.b16 %v400, %v399
    %v424 = vpack.c.b16 %v402, %v401
    %v425 = vpack.c.b16 %v404, %v403
    %v426 = vpack.c.b16 %v406, %v405
    %v427 = vpack.c.b16 %v408, %v407
    %v428 = vpack.c.b16 %v410, %v409
    %v429 = vpack.c.b16 %v412, %v411
    %v430 = vpack.c.b16 %v414, %v413
    %447 = vmatprep.subr.bf16.mxu0 0
    %448 = vmatpush1.bf16.msra.mxu0 %v422
    %449 = vmatprep.subr.bf16.mxu0 0
    %450 = vmatpush1.bf16.msra.mxu0 %v421
    %451 = vmatprep.subr.bf16.mxu0 0
    %452 = vmatpush1.bf16.msra.mxu0 %v420
    %453 = vmatprep.subr.bf16.mxu0 0
    %454 = vmatpush1.bf16.msra.mxu0 %v419
    %455 = vmatprep.subr.bf16.mxu0 0
    %456 = vmatpush1.bf16.msra.mxu0 %v418
    %457 = vmatprep.subr.bf16.mxu0 0
    %458 = vmatpush1.bf16.msra.mxu0 %v417
    %459 = vmatprep.subr.bf16.mxu0 0
    %460 = vmatpush1.bf16.msra.mxu0 %v416
    %461 = vmatprep.subr.bf16.mxu0 0
    %462 = vmatpush1.bf16.msra.mxu0 %v415
    %463 = vmatprep.subr.bf16.mxu0 0
    %464 = vmatpush2.bf16.msra.mxu0 %v430
    %465 = vmatprep.subr.bf16.mxu0 0
    %466 = vmatpush2.bf16.msra.mxu0 %v429
    %467 = vmatprep.subr.bf16.mxu0 0
    %468 = vmatpush2.bf16.msra.mxu0 %v428
    %469 = vmatprep.subr.bf16.mxu0 0
    %470 = vmatpush2.bf16.msra.mxu0 %v427
    %471 = vmatprep.subr.bf16.mxu0 0
    %472 = vmatpush2.bf16.msra.mxu0 %v426
    %473 = vmatprep.subr.bf16.mxu0 0
    %474 = vmatpush2.bf16.msra.mxu0 %v425
    %475 = vmatprep.subr.bf16.mxu0 0
    %476 = vmatpush2.bf16.msra.mxu0 %v424
    %477 = vmatprep.subr.bf16.mxu0 0
    %478 = vmatpush2.bf16.msra.mxu0 %v423
    %479 = vmatprep.mubr.bf16.mxu0 %v288
    %480 = vmatmul.mubr.bf16.gmra.mxu0 %v287
    %v481 = vpop.f32.mrf.mxu0
    %v482 = vadd.f32 %v189, %v481
    %v483 = vpop.f32.mrf.mxu0
    %v484 = vpop.f32.mrf.mxu0
    %v485 = vadd.f32 %v189, %v484
    %v486 = vpop.f32.mrf.mxu0
    %487 = vmatprep.mubr.bf16.mxu0 %v290
    %488 = vmatmul.mubr.bf16.gmra.mxu0 %v289
    %v489 = vpop.f32.mrf.mxu0
    %v490 = vadd.f32 %v189, %v489
    %v491 = vpop.f32.mrf.mxu0
    %v492 = vpop.f32.mrf.mxu0
    %v493 = vadd.f32 %v189, %v492
    %v494 = vpop.f32.mrf.mxu0
    %495 = vmatprep.mubr.bf16.mxu0 %v292
    %496 = vmatmul.mubr.bf16.gmra.mxu0 %v291
    %v497 = vpop.f32.mrf.mxu0
    %v498 = vadd.f32 %v189, %v497
    %v499 = vpop.f32.mrf.mxu0
    %v500 = vpop.f32.mrf.mxu0
    %v501 = vadd.f32 %v189, %v500
    %v502 = vpop.f32.mrf.mxu0
    %503 = vmatprep.mubr.bf16.mxu0 %v294
    %504 = vmatmul.mubr.bf16.gmra.mxu0 %v293
    %v505 = vpop.f32.mrf.mxu0
    %v506 = vadd.f32 %v189, %v505
    %v507 = vpop.f32.mrf.mxu0
    %v508 = vpop.f32.mrf.mxu0
    %v509 = vadd.f32 %v189, %v508
    %v510 = vpop.f32.mrf.mxu0
    %511 = vmatprep.mubr.bf16.mxu0 %v296
    %512 = vmatmul.mubr.bf16.gmra.mxu0 %v295
    %v513 = vpop.f32.mrf.mxu0
    %v514 = vadd.f32 %v189, %v513
    %v515 = vpop.f32.mrf.mxu0
    %v516 = vpop.f32.mrf.mxu0
    %v517 = vadd.f32 %v189, %v516
    %v518 = vpop.f32.mrf.mxu0
    %519 = vmatprep.mubr.bf16.mxu0 %v298
    %520 = vmatmul.mubr.bf16.gmra.mxu0 %v297
    %v521 = vpop.f32.mrf.mxu0
    %v522 = vadd.f32 %v189, %v521
    %v523 = vpop.f32.mrf.mxu0
    %v524 = vpop.f32.mrf.mxu0
    %v525 = vadd.f32 %v189, %v524
    %v526 = vpop.f32.mrf.mxu0
    %527 = vmatprep.mubr.bf16.mxu0 %v300
    %528 = vmatmul.mubr.bf16.gmra.mxu0 %v299
    %v529 = vpop.f32.mrf.mxu0
    %v530 = vadd.f32 %v189, %v529
    %v531 = vpop.f32.mrf.mxu0
    %v532 = vpop.f32.mrf.mxu0
    %v533 = vadd.f32 %v189, %v532
    %v534 = vpop.f32.mrf.mxu0
    %535 = vmatprep.mubr.bf16.mxu0 %v302
    %536 = vmatmul.mubr.bf16.gmra.mxu0 %v301
    %v537 = vpop.f32.mrf.mxu0
    %v538 = vadd.f32 %v189, %v537
    %v539 = vpop.f32.mrf.mxu0
    %v540 = vpop.f32.mrf.mxu0
    %v541 = vadd.f32 %v189, %v540
    %v542 = vpop.f32.mrf.mxu0
    %543 = vmatprep.mubr.bf16.mxu0 %v304
    %544 = vmatmul.mubr.bf16.gmra.mxu0 %v303
    %v545 = vpop.f32.mrf.mxu0
    %v546 = vadd.f32 %v189, %v545
    %v547 = vpop.f32.mrf.mxu0
    %v548 = vpop.f32.mrf.mxu0
    %v549 = vadd.f32 %v189, %v548
    %v550 = vpop.f32.mrf.mxu0
    %551 = vmatprep.mubr.bf16.mxu0 %v306
    %552 = vmatmul.mubr.bf16.gmra.mxu0 %v305
    %v553 = vpop.f32.mrf.mxu0
    %v554 = vadd.f32 %v189, %v553
    %v555 = vpop.f32.mrf.mxu0
    %v556 = vpop.f32.mrf.mxu0
    %v557 = vadd.f32 %v189, %v556
    %v558 = vpop.f32.mrf.mxu0
    %559 = vmatprep.mubr.bf16.mxu0 %v308
    %560 = vmatmul.mubr.bf16.gmra.mxu0 %v307
    %v561 = vpop.f32.mrf.mxu0
    %v562 = vadd.f32 %v189, %v561
    %v563 = vpop.f32.mrf.mxu0
    %v564 = vpop.f32.mrf.mxu0
    %v565 = vadd.f32 %v189, %v564
    %v566 = vpop.f32.mrf.mxu0
    %567 = vmatprep.mubr.bf16.mxu0 %v310
    %568 = vmatmul.mubr.bf16.gmra.mxu0 %v309
    %v569 = vpop.f32.mrf.mxu0
    %v570 = vadd.f32 %v189, %v569
    %v571 = vpop.f32.mrf.mxu0
    %v572 = vpop.f32.mrf.mxu0
    %v573 = vadd.f32 %v189, %v572
    %v574 = vpop.f32.mrf.mxu0
    %575 = vmatprep.mubr.bf16.mxu0 %v312
    %576 = vmatmul.mubr.bf16.gmra.mxu0 %v311
    %v577 = vpop.f32.mrf.mxu0
    %v578 = vadd.f32 %v189, %v577
    %v579 = vpop.f32.mrf.mxu0
    %v580 = vpop.f32.mrf.mxu0
    %v581 = vadd.f32 %v189, %v580
    %v582 = vpop.f32.mrf.mxu0
    %583 = vmatprep.mubr.bf16.mxu0 %v314
    %584 = vmatmul.mubr.bf16.gmra.mxu0 %v313
    %v585 = vpop.f32.mrf.mxu0
    %v586 = vadd.f32 %v189, %v585
    %v587 = vpop.f32.mrf.mxu0
    %v588 = vpop.f32.mrf.mxu0
    %v589 = vadd.f32 %v189, %v588
    %v590 = vpop.f32.mrf.mxu0
    %591 = vmatprep.mubr.bf16.mxu0 %v316
    %592 = vmatmul.mubr.bf16.gmra.mxu0 %v315
    %v593 = vpop.f32.mrf.mxu0
    %v594 = vadd.f32 %v189, %v593
    %v595 = vpop.f32.mrf.mxu0
    %v596 = vpop.f32.mrf.mxu0
    %v597 = vadd.f32 %v189, %v596
    %v598 = vpop.f32.mrf.mxu0
    %599 = vmatprep.mubr.bf16.mxu0 %v318
    %600 = vmatmul.mubr.bf16.gmra.mxu0 %v317
    %v601 = vpop.f32.mrf.mxu0
    %v602 = vadd.f32 %v189, %v601
    %v603 = vpop.f32.mrf.mxu0
    %v604 = vpop.f32.mrf.mxu0
    %v605 = vadd.f32 %v189, %v604
    %v606 = vpop.f32.mrf.mxu0
    %607 = vdwg.mxu0
    %v608 = vmax.f32 %v482, 0.0
    %v609 = vmax.f32 %v485, 0.0
    %v610 = vmax.f32 %v490, 0.0
    %v611 = vmax.f32 %v493, 0.0
    %v612 = vmax.f32 %v498, 0.0
    %v613 = vmax.f32 %v501, 0.0
    %v614 = vmax.f32 %v506, 0.0
    %v615 = vmax.f32 %v509, 0.0
    %v616 = vmax.f32 %v514, 0.0
    %v617 = vmax.f32 %v517, 0.0
    %v618 = vmax.f32 %v522, 0.0
    %v619 = vmax.f32 %v525, 0.0
    %v620 = vmax.f32 %v530, 0.0
    %v621 = vmax.f32 %v533, 0.0
    %v622 = vmax.f32 %v538, 0.0
    %v623 = vmax.f32 %v541, 0.0
    %v624 = vmax.f32 %v546, 0.0
    %v625 = vmax.f32 %v549, 0.0
    %v626 = vmax.f32 %v554, 0.0
    %v627 = vmax.f32 %v557, 0.0
    %v628 = vmax.f32 %v562, 0.0
    %v629 = vmax.f32 %v565, 0.0
    %v630 = vmax.f32 %v570, 0.0
    %v631 = vmax.f32 %v573, 0.0
    %v632 = vmax.f32 %v578, 0.0
    %v633 = vmax.f32 %v581, 0.0
    %v634 = vmax.f32 %v586, 0.0
    %v635 = vmax.f32 %v589, 0.0
    %v636 = vmax.f32 %v594, 0.0
    %v637 = vmax.f32 %v597, 0.0
    %v638 = vmax.f32 %v602, 0.0
    %v639 = vmax.f32 %v605, 0.0
    %v640 = vpack.c.bf16 %v609, %v608
    %v641 = vpack.c.bf16 %v611, %v610
    %v642 = vpack.c.bf16 %v613, %v612
    %v643 = vpack.c.bf16 %v615, %v614
    %v644 = vpack.c.bf16 %v617, %v616
    %v645 = vpack.c.bf16 %v619, %v618
    %v646 = vpack.c.bf16 %v621, %v620
    %v647 = vpack.c.bf16 %v623, %v622
    %v648 = vpack.c.bf16 %v625, %v624
    %v649 = vpack.c.bf16 %v627, %v626
    %v650 = vpack.c.bf16 %v629, %v628
    %v651 = vpack.c.bf16 %v631, %v630
    %v652 = vpack.c.bf16 %v633, %v632
    %v653 = vpack.c.bf16 %v635, %v634
    %v654 = vpack.c.bf16 %v637, %v636
    %v655 = vpack.c.bf16 %v639, %v638
    %v656 = vld [vmem:[#allocation7] sm:$0xf]
    %v657 = vld [vmem:[#allocation7 + $0x4] sm:$0xf]
    %v658 = vld [vmem:[#allocation7 + $0x8] sm:$0xf]
    %v659 = vld [vmem:[#allocation7 + $0xc] sm:$0xf]
    %v660 = vld [vmem:[#allocation7 + $0x10] sm:$0xf]
    %v661 = vld [vmem:[#allocation7 + $0x14] sm:$0xf]
    %v662 = vld [vmem:[#allocation7 + $0x18] sm:$0xf]
    %v663 = vld [vmem:[#allocation7 + $0x1c] sm:$0xf]
    %v664 = vld [vmem:[#allocation7 + $0x20] sm:$0xf]
    %v665 = vld [vmem:[#allocation7 + $0x24] sm:$0xf]
    %v666 = vld [vmem:[#allocation7 + $0x28] sm:$0xf]
    %v667 = vld [vmem:[#allocation7 + $0x2c] sm:$0xf]
    %v668 = vld [vmem:[#allocation7 + $0x30] sm:$0xf]
    %v669 = vld [vmem:[#allocation7 + $0x34] sm:$0xf]
    %v670 = vld [vmem:[#allocation7 + $0x38] sm:$0xf]
    %v671 = vld [vmem:[#allocation7 + $0x3c] sm:$0xf]
    %v688 = vunpack.c.l.b16 %v656
    %v689 = vunpack.c.l.b16 %v657
    %v690 = vunpack.c.l.b16 %v658
    %v691 = vunpack.c.l.b16 %v659
    %v692 = vunpack.c.l.b16 %v660
    %v693 = vunpack.c.l.b16 %v661
    %v694 = vunpack.c.l.b16 %v662
    %v695 = vunpack.c.l.b16 %v663
    %v696 = vunpack.c.l.b16 %v664
    %v697 = vunpack.c.l.b16 %v665
    %v698 = vunpack.c.l.b16 %v666
    %v699 = vunpack.c.l.b16 %v667
    %v700 = vunpack.c.l.b16 %v668
    %v701 = vunpack.c.l.b16 %v669
    %v702 = vunpack.c.l.b16 %v670
    %v703 = vunpack.c.l.b16 %v671
    %v704 = vpack.c.b16 %v689, %v688
    %v705 = vpack.c.b16 %v691, %v690
    %v706 = vpack.c.b16 %v693, %v692
    %v707 = vpack.c.b16 %v695, %v694
    %v708 = vpack.c.b16 %v697, %v696
    %v709 = vpack.c.b16 %v699, %v698
    %v710 = vpack.c.b16 %v701, %v700
    %v711 = vpack.c.b16 %v703, %v702
    %720 = vmatprep.subr.bf16.mxu0 0
    %721 = vmatpush1.bf16.msra.mxu0 %v711
    %722 = vmatprep.subr.bf16.mxu0 0
    %723 = vmatpush1.bf16.msra.mxu0 %v710
    %724 = vmatprep.subr.bf16.mxu0 0
    %725 = vmatpush1.bf16.msra.mxu0 %v709
    %726 = vmatprep.subr.bf16.mxu0 0
    %727 = vmatpush1.bf16.msra.mxu0 %v708
    %728 = vmatprep.subr.bf16.mxu0 0
    %729 = vmatpush1.bf16.msra.mxu0 %v707
    %730 = vmatprep.subr.bf16.mxu0 0
    %731 = vmatpush1.bf16.msra.mxu0 %v706
    %732 = vmatprep.subr.bf16.mxu0 0
    %733 = vmatpush1.bf16.msra.mxu0 %v705
    %734 = vmatprep.subr.bf16.mxu0 0
    %735 = vmatpush1.bf16.msra.mxu0 %v704
    %736 = vmatprep.subr.bf16.mxu0 0
    %737 = vmatpush2.bf16.msra.mxu0 0
    %738 = vmatprep.subr.bf16.mxu0 0
    %739 = vmatpush2.bf16.msra.mxu0 0
    %740 = vmatprep.subr.bf16.mxu0 0
    %741 = vmatpush2.bf16.msra.mxu0 0
    %742 = vmatprep.subr.bf16.mxu0 0
    %743 = vmatpush2.bf16.msra.mxu0 0
    %744 = vmatprep.subr.bf16.mxu0 0
    %745 = vmatpush2.bf16.msra.mxu0 0
    %746 = vmatprep.subr.bf16.mxu0 0
    %747 = vmatpush2.bf16.msra.mxu0 0
    %748 = vmatprep.subr.bf16.mxu0 0
    %749 = vmatpush2.bf16.msra.mxu0 0
    %750 = vmatprep.subr.bf16.mxu0 0
    %751 = vmatpush2.bf16.msra.mxu0 0
    %752 = vmatprep.mubr.bf16.mxu0 0
    %753 = vmatmul.mubr.bf16.gmra.mxu0 %v640
    %v754 = vpop.f32.mrf.mxu0
    %v755 = vadd.f32 0.0, %v754
    %v756 = vpop.f32.mrf.mxu0
    %v757 = vpop.f32.mrf.mxu0
    %v758 = vadd.f32 0.0, %v757
    %v759 = vpop.f32.mrf.mxu0
    %760 = vmatprep.mubr.bf16.mxu0 0
    %761 = vmatmul.mubr.bf16.gmra.mxu0 %v641
    %v762 = vpop.f32.mrf.mxu0
    %v763 = vadd.f32 0.0, %v762
    %v764 = vpop.f32.mrf.mxu0
    %v765 = vpop.f32.mrf.mxu0
    %v766 = vadd.f32 0.0, %v765
    %v767 = vpop.f32.mrf.mxu0
    %768 = vmatprep.mubr.bf16.mxu0 0
    %769 = vmatmul.mubr.bf16.gmra.mxu0 %v642
    %v770 = vpop.f32.mrf.mxu0
    %v771 = vadd.f32 0.0, %v770
    %v772 = vpop.f32.mrf.mxu0
    %v773 = vpop.f32.mrf.mxu0
    %v774 = vadd.f32 0.0, %v773
    %v775 = vpop.f32.mrf.mxu0
    %776 = vmatprep.mubr.bf16.mxu0 0
    %777 = vmatmul.mubr.bf16.gmra.mxu0 %v643
    %v778 = vpop.f32.mrf.mxu0
    %v779 = vadd.f32 0.0, %v778
    %v780 = vpop.f32.mrf.mxu0
    %v781 = vpop.f32.mrf.mxu0
    %v782 = vadd.f32 0.0, %v781
    %v783 = vpop.f32.mrf.mxu0
    %784 = vmatprep.mubr.bf16.mxu0 0
    %785 = vmatmul.mubr.bf16.gmra.mxu0 %v644
    %v786 = vpop.f32.mrf.mxu0
    %v787 = vadd.f32 0.0, %v786
    %v788 = vpop.f32.mrf.mxu0
    %v789 = vpop.f32.mrf.mxu0
    %v790 = vadd.f32 0.0, %v789
    %v791 = vpop.f32.mrf.mxu0
    %792 = vmatprep.mubr.bf16.mxu0 0
    %793 = vmatmul.mubr.bf16.gmra.mxu0 %v645
    %v794 = vpop.f32.mrf.mxu0
    %v795 = vadd.f32 0.0, %v794
    %v796 = vpop.f32.mrf.mxu0
    %v797 = vpop.f32.mrf.mxu0
    %v798 = vadd.f32 0.0, %v797
    %v799 = vpop.f32.mrf.mxu0
    %800 = vmatprep.mubr.bf16.mxu0 0
    %801 = vmatmul.mubr.bf16.gmra.mxu0 %v646
    %v802 = vpop.f32.mrf.mxu0
    %v803 = vadd.f32 0.0, %v802
    %v804 = vpop.f32.mrf.mxu0
    %v805 = vpop.f32.mrf.mxu0
    %v806 = vadd.f32 0.0, %v805
    %v807 = vpop.f32.mrf.mxu0
    %808 = vmatprep.mubr.bf16.mxu0 0
    %809 = vmatmul.mubr.bf16.gmra.mxu0 %v647
    %v810 = vpop.f32.mrf.mxu0
    %v811 = vadd.f32 0.0, %v810
    %v812 = vpop.f32.mrf.mxu0
    %v813 = vpop.f32.mrf.mxu0
    %v814 = vadd.f32 0.0, %v813
    %v815 = vpop.f32.mrf.mxu0
    %816 = vmatprep.mubr.bf16.mxu0 0
    %817 = vmatmul.mubr.bf16.gmra.mxu0 %v648
    %v818 = vpop.f32.mrf.mxu0
    %v819 = vadd.f32 0.0, %v818
    %v820 = vpop.f32.mrf.mxu0
    %v821 = vpop.f32.mrf.mxu0
    %v822 = vadd.f32 0.0, %v821
    %v823 = vpop.f32.mrf.mxu0
    %824 = vmatprep.mubr.bf16.mxu0 0
    %825 = vmatmul.mubr.bf16.gmra.mxu0 %v649
    %v826 = vpop.f32.mrf.mxu0
    %v827 = vadd.f32 0.0, %v826
    %v828 = vpop.f32.mrf.mxu0
    %v829 = vpop.f32.mrf.mxu0
    %v830 = vadd.f32 0.0, %v829
    %v831 = vpop.f32.mrf.mxu0
    %832 = vmatprep.mubr.bf16.mxu0 0
    %833 = vmatmul.mubr.bf16.gmra.mxu0 %v650
    %v834 = vpop.f32.mrf.mxu0
    %v835 = vadd.f32 0.0, %v834
    %v836 = vpop.f32.mrf.mxu0
    %v837 = vpop.f32.mrf.mxu0
    %v838 = vadd.f32 0.0, %v837
    %v839 = vpop.f32.mrf.mxu0
    %840 = vmatprep.mubr.bf16.mxu0 0
    %841 = vmatmul.mubr.bf16.gmra.mxu0 %v651
    %v842 = vpop.f32.mrf.mxu0
    %v843 = vadd.f32 0.0, %v842
    %v844 = vpop.f32.mrf.mxu0
    %v845 = vpop.f32.mrf.mxu0
    %v846 = vadd.f32 0.0, %v845
    %v847 = vpop.f32.mrf.mxu0
    %848 = vmatprep.mubr.bf16.mxu0 0
    %849 = vmatmul.mubr.bf16.gmra.mxu0 %v652
    %v850 = vpop.f32.mrf.mxu0
    %v851 = vadd.f32 0.0, %v850
    %v852 = vpop.f32.mrf.mxu0
    %v853 = vpop.f32.mrf.mxu0
    %v854 = vadd.f32 0.0, %v853
    %v855 = vpop.f32.mrf.mxu0
    %856 = vmatprep.mubr.bf16.mxu0 0
    %857 = vmatmul.mubr.bf16.gmra.mxu0 %v653
    %v858 = vpop.f32.mrf.mxu0
    %v859 = vadd.f32 0.0, %v858
    %v860 = vpop.f32.mrf.mxu0
    %v861 = vpop.f32.mrf.mxu0
    %v862 = vadd.f32 0.0, %v861
    %v863 = vpop.f32.mrf.mxu0
    %864 = vmatprep.mubr.bf16.mxu0 0
    %865 = vmatmul.mubr.bf16.gmra.mxu0 %v654
    %v866 = vpop.f32.mrf.mxu0
    %v867 = vadd.f32 0.0, %v866
    %v868 = vpop.f32.mrf.mxu0
    %v869 = vpop.f32.mrf.mxu0
    %v870 = vadd.f32 0.0, %v869
    %v871 = vpop.f32.mrf.mxu0
    %872 = vmatprep.mubr.bf16.mxu0 0
    %873 = vmatmul.mubr.bf16.gmra.mxu0 %v655
    %v874 = vpop.f32.mrf.mxu0
    %v875 = vadd.f32 0.0, %v874
    %v876 = vpop.f32.mrf.mxu0
    %v877 = vpop.f32.mrf.mxu0
    %v878 = vadd.f32 0.0, %v877
    %v879 = vpop.f32.mrf.mxu0
    %880 = vdwg.mxu0
    %v881 = vpack.c.bf16 %v758, %v755
    %v882 = vpack.c.bf16 %v766, %v763
    %v883 = vpack.c.bf16 %v774, %v771
    %v884 = vpack.c.bf16 %v782, %v779
    %v885 = vpack.c.bf16 %v790, %v787
    %v886 = vpack.c.bf16 %v798, %v795
    %v887 = vpack.c.bf16 %v806, %v803
    %v888 = vpack.c.bf16 %v814, %v811
    %v889 = vpack.c.bf16 %v822, %v819
    %v890 = vpack.c.bf16 %v830, %v827
    %v891 = vpack.c.bf16 %v838, %v835
    %v892 = vpack.c.bf16 %v846, %v843
    %v893 = vpack.c.bf16 %v854, %v851
    %v894 = vpack.c.bf16 %v862, %v859
    %v895 = vpack.c.bf16 %v870, %v867
    %v896 = vpack.c.bf16 %v878, %v875
    %v897 = vld [vmem:[%s4] sm:$0x1]
    %v899 = vlaneseq
    %v900 = vshrl.u32 %v899, 7
    %v901 = vsub.s32 0, %v900
    %v902 = vrot.slane %v897, %v901
    %904 = vmatprep.subr.bf16.mxu0 0
    %905 = vmatpush1.bf16.msra.mxu0 %v888
    %906 = vmatprep.subr.bf16.mxu0 0
    %907 = vmatpush1.bf16.msra.mxu0 %v887
    %908 = vmatprep.subr.bf16.mxu0 0
    %909 = vmatpush1.bf16.msra.mxu0 %v886
    %910 = vmatprep.subr.bf16.mxu0 0
    %911 = vmatpush1.bf16.msra.mxu0 %v885
    %912 = vmatprep.subr.bf16.mxu0 0
    %913 = vmatpush1.bf16.msra.mxu0 %v884
    %914 = vmatprep.subr.bf16.mxu0 0
    %915 = vmatpush1.bf16.msra.mxu0 %v883
    %916 = vmatprep.subr.bf16.mxu0 0
    %917 = vmatpush1.bf16.msra.mxu0 %v882
    %918 = vmatprep.subr.bf16.mxu0 0
    %919 = vmatpush1.bf16.msra.mxu0 %v881
    %920 = vmatprep.subr.bf16.mxu0 0
    %921 = vmatpush2.bf16.msra.mxu0 %v896
    %922 = vmatprep.subr.bf16.mxu0 0
    %923 = vmatpush2.bf16.msra.mxu0 %v895
    %924 = vmatprep.subr.bf16.mxu0 0
    %925 = vmatpush2.bf16.msra.mxu0 %v894
    %926 = vmatprep.subr.bf16.mxu0 0
    %927 = vmatpush2.bf16.msra.mxu0 %v893
    %928 = vmatprep.subr.bf16.mxu0 0
    %929 = vmatpush2.bf16.msra.mxu0 %v892
    %930 = vmatprep.subr.bf16.mxu0 0
    %931 = vmatpush2.bf16.msra.mxu0 %v891
    %932 = vmatprep.subr.bf16.mxu0 0
    %933 = vmatpush2.bf16.msra.mxu0 %v890
    %934 = vmatprep.subr.bf16.mxu0 0
    %935 = vmatpush2.bf16.msra.mxu0 %v889
    %936 = vmatprep.mubr.bf16.mxu0 %v288
    %937 = vmatmul.mubr.bf16.gmra.mxu0 %v287
    %v938 = vpop.f32.mrf.mxu0
    %v939 = vadd.f32 %v902, %v938
    %v940 = vpop.f32.mrf.mxu0
    %v941 = vpop.f32.mrf.mxu0
    %v942 = vadd.f32 %v902, %v941
    %v943 = vpop.f32.mrf.mxu0
    %944 = vmatprep.mubr.bf16.mxu0 %v290
    %945 = vmatmul.mubr.bf16.gmra.mxu0 %v289
    %v946 = vpop.f32.mrf.mxu0
    %v947 = vadd.f32 %v902, %v946
    %v948 = vpop.f32.mrf.mxu0
    %v949 = vpop.f32.mrf.mxu0
    %v950 = vadd.f32 %v902, %v949
    %v951 = vpop.f32.mrf.mxu0
    %952 = vmatprep.mubr.bf16.mxu0 %v292
    %953 = vmatmul.mubr.bf16.gmra.mxu0 %v291
    %v954 = vpop.f32.mrf.mxu0
    %v955 = vadd.f32 %v902, %v954
    %v956 = vpop.f32.mrf.mxu0
    %v957 = vpop.f32.mrf.mxu0
    %v958 = vadd.f32 %v902, %v957
    %v959 = vpop.f32.mrf.mxu0
    %960 = vmatprep.mubr.bf16.mxu0 %v294
    %961 = vmatmul.mubr.bf16.gmra.mxu0 %v293
    %v962 = vpop.f32.mrf.mxu0
    %v963 = vadd.f32 %v902, %v962
    %v964 = vpop.f32.mrf.mxu0
    %v965 = vpop.f32.mrf.mxu0
    %v966 = vadd.f32 %v902, %v965
    %v967 = vpop.f32.mrf.mxu0
    %968 = vmatprep.mubr.bf16.mxu0 %v296
    %969 = vmatmul.mubr.bf16.gmra.mxu0 %v295
    %v970 = vpop.f32.mrf.mxu0
    %v971 = vadd.f32 %v902, %v970
    %v972 = vpop.f32.mrf.mxu0
    %v973 = vpop.f32.mrf.mxu0
    %v974 = vadd.f32 %v902, %v973
    %v975 = vpop.f32.mrf.mxu0
    %976 = vmatprep.mubr.bf16.mxu0 %v298
    %977 = vmatmul.mubr.bf16.gmra.mxu0 %v297
    %v978 = vpop.f32.mrf.mxu0
    %v979 = vadd.f32 %v902, %v978
    %v980 = vpop.f32.mrf.mxu0
    %v981 = vpop.f32.mrf.mxu0
    %v982 = vadd.f32 %v902, %v981
    %v983 = vpop.f32.mrf.mxu0
    %984 = vmatprep.mubr.bf16.mxu0 %v300
    %985 = vmatmul.mubr.bf16.gmra.mxu0 %v299
    %v986 = vpop.f32.mrf.mxu0
    %v987 = vadd.f32 %v902, %v986
    %v988 = vpop.f32.mrf.mxu0
    %v989 = vpop.f32.mrf.mxu0
    %v990 = vadd.f32 %v902, %v989
    %v991 = vpop.f32.mrf.mxu0
    %992 = vmatprep.mubr.bf16.mxu0 %v302
    %993 = vmatmul.mubr.bf16.gmra.mxu0 %v301
    %v994 = vpop.f32.mrf.mxu0
    %v995 = vadd.f32 %v902, %v994
    %v996 = vpop.f32.mrf.mxu0
    %v997 = vpop.f32.mrf.mxu0
    %v998 = vadd.f32 %v902, %v997
    %v999 = vpop.f32.mrf.mxu0
    %1000 = vmatprep.mubr.bf16.mxu0 %v304
    %1001 = vmatmul.mubr.bf16.gmra.mxu0 %v303
    %v1002 = vpop.f32.mrf.mxu0
    %v1003 = vadd.f32 %v902, %v1002
    %v1004 = vpop.f32.mrf.mxu0
    %v1005 = vpop.f32.mrf.mxu0
    %v1006 = vadd.f32 %v902, %v1005
    %v1007 = vpop.f32.mrf.mxu0
    %1008 = vmatprep.mubr.bf16.mxu0 %v306
    %1009 = vmatmul.mubr.bf16.gmra.mxu0 %v305
    %v1010 = vpop.f32.mrf.mxu0
    %v1011 = vadd.f32 %v902, %v1010
    %v1012 = vpop.f32.mrf.mxu0
    %v1013 = vpop.f32.mrf.mxu0
    %v1014 = vadd.f32 %v902, %v1013
    %v1015 = vpop.f32.mrf.mxu0
    %1016 = vmatprep.mubr.bf16.mxu0 %v308
    %1017 = vmatmul.mubr.bf16.gmra.mxu0 %v307
    %v1018 = vpop.f32.mrf.mxu0
    %v1019 = vadd.f32 %v902, %v1018
    %v1020 = vpop.f32.mrf.mxu0
    %v1021 = vpop.f32.mrf.mxu0
    %v1022 = vadd.f32 %v902, %v1021
    %v1023 = vpop.f32.mrf.mxu0
    %1024 = vmatprep.mubr.bf16.mxu0 %v310
    %1025 = vmatmul.mubr.bf16.gmra.mxu0 %v309
    %v1026 = vpop.f32.mrf.mxu0
    %v1027 = vadd.f32 %v902, %v1026
    %v1028 = vpop.f32.mrf.mxu0
    %v1029 = vpop.f32.mrf.mxu0
    %v1030 = vadd.f32 %v902, %v1029
    %v1031 = vpop.f32.mrf.mxu0
    %1032 = vmatprep.mubr.bf16.mxu0 %v312
    %1033 = vmatmul.mubr.bf16.gmra.mxu0 %v311
    %v1034 = vpop.f32.mrf.mxu0
    %v1035 = vadd.f32 %v902, %v1034
    %v1036 = vpop.f32.mrf.mxu0
    %v1037 = vpop.f32.mrf.mxu0
    %v1038 = vadd.f32 %v902, %v1037
    %v1039 = vpop.f32.mrf.mxu0
    %1040 = vmatprep.mubr.bf16.mxu0 %v314
    %1041 = vmatmul.mubr.bf16.gmra.mxu0 %v313
    %v1042 = vpop.f32.mrf.mxu0
    %v1043 = vadd.f32 %v902, %v1042
    %v1044 = vpop.f32.mrf.mxu0
    %v1045 = vpop.f32.mrf.mxu0
    %v1046 = vadd.f32 %v902, %v1045
    %v1047 = vpop.f32.mrf.mxu0
    %1048 = vmatprep.mubr.bf16.mxu0 %v316
    %1049 = vmatmul.mubr.bf16.gmra.mxu0 %v315
    %v1050 = vpop.f32.mrf.mxu0
    %v1051 = vadd.f32 %v902, %v1050
    %v1052 = vpop.f32.mrf.mxu0
    %v1053 = vpop.f32.mrf.mxu0
    %v1054 = vadd.f32 %v902, %v1053
    %v1055 = vpop.f32.mrf.mxu0
    %1056 = vmatprep.mubr.bf16.mxu0 %v318
    %1057 = vmatmul.mubr.bf16.gmra.mxu0 %v317
    %v1058 = vpop.f32.mrf.mxu0
    %v1059 = vadd.f32 %v902, %v1058
    %v1060 = vpop.f32.mrf.mxu0
    %v1061 = vpop.f32.mrf.mxu0
    %v1062 = vadd.f32 %v902, %v1061
    %v1063 = vpop.f32.mrf.mxu0
    %1064 = vdwg.mxu0
    %v1065 = vld [vmem:[#allocation8] sm:$0xff]
    %v1066 = vld [vmem:[#allocation8 + $0x8] sm:$0xff]
    %1067 = vmatprep.subr.mxu0 0.0
    %1068 = vmatpush1.msra.mxu0 %v998
    %1069 = vmatprep.subr.mxu0 0.0
    %1070 = vmatpush1.msra.mxu0 %v995
    %1071 = vmatprep.subr.mxu0 0.0
    %1072 = vmatpush1.msra.mxu0 %v990
    %1073 = vmatprep.subr.mxu0 0.0
    %1074 = vmatpush1.msra.mxu0 %v987
    %1075 = vmatprep.subr.mxu0 0.0
    %1076 = vmatpush1.msra.mxu0 %v982
    %1077 = vmatprep.subr.mxu0 0.0
    %1078 = vmatpush1.msra.mxu0 %v979
    %1079 = vmatprep.subr.mxu0 0.0
    %1080 = vmatpush1.msra.mxu0 %v974
    %1081 = vmatprep.subr.mxu0 0.0
    %1082 = vmatpush1.msra.mxu0 %v971
    %1083 = vmatprep.subr.mxu0 0.0
    %1084 = vmatpush1.msra.mxu0 %v966
    %1085 = vmatprep.subr.mxu0 0.0
    %1086 = vmatpush1.msra.mxu0 %v963
    %1087 = vmatprep.subr.mxu0 0.0
    %1088 = vmatpush1.msra.mxu0 %v958
    %1089 = vmatprep.subr.mxu0 0.0
    %1090 = vmatpush1.msra.mxu0 %v955
    %1091 = vmatprep.subr.mxu0 0.0
    %1092 = vmatpush1.msra.mxu0 %v950
    %1093 = vmatprep.subr.mxu0 0.0
    %1094 = vmatpush1.msra.mxu0 %v947
    %1095 = vmatprep.subr.mxu0 0.0
    %1096 = vmatpush1.msra.mxu0 %v942
    %1097 = vmatprep.subr.mxu0 0.0
    %1098 = vmatpush1.msra.mxu0 %v939
    %1099 = vmatprep.subr.mxu0 0.0
    %1100 = vmatpush2.msra.mxu0 %v1062
    %1101 = vmatprep.subr.mxu0 0.0
    %1102 = vmatpush2.msra.mxu0 %v1059
    %1103 = vmatprep.subr.mxu0 0.0
    %1104 = vmatpush2.msra.mxu0 %v1054
    %1105 = vmatprep.subr.mxu0 0.0
    %1106 = vmatpush2.msra.mxu0 %v1051
    %1107 = vmatprep.subr.mxu0 0.0
    %1108 = vmatpush2.msra.mxu0 %v1046
    %1109 = vmatprep.subr.mxu0 0.0
    %1110 = vmatpush2.msra.mxu0 %v1043
    %1111 = vmatprep.subr.mxu0 0.0
    %1112 = vmatpush2.msra.mxu0 %v1038
    %1113 = vmatprep.subr.mxu0 0.0
    %1114 = vmatpush2.msra.mxu0 %v1035
    %1115 = vmatprep.subr.mxu0 0.0
    %1116 = vmatpush2.msra.mxu0 %v1030
    %1117 = vmatprep.subr.mxu0 0.0
    %1118 = vmatpush2.msra.mxu0 %v1027
    %1119 = vmatprep.subr.mxu0 0.0
    %1120 = vmatpush2.msra.mxu0 %v1022
    %1121 = vmatprep.subr.mxu0 0.0
    %1122 = vmatpush2.msra.mxu0 %v1019
    %1123 = vmatprep.subr.mxu0 0.0
    %1124 = vmatpush2.msra.mxu0 %v1014
    %1125 = vmatprep.subr.mxu0 0.0
    %1126 = vmatpush2.msra.mxu0 %v1011
    %1127 = vmatprep.subr.mxu0 0.0
    %1128 = vmatpush2.msra.mxu0 %v1006
    %1129 = vmatprep.subr.mxu0 0.0
    %1130 = vmatpush2.msra.mxu0 %v1003
    %1131 = vmatprep.mubr.f32.mxu0 %v1066
    %1132 = vmatmul.mubr.f32.gmra.mxu0 %v1065
    %v1133 = vpop.f32.mrf.mxu0
    %v1134 = vadd.f32 0.0, %v1133
    %v1135 = vpop.f32.mrf.mxu0
    %1136 = vdwg.mxu0
    %v1137 = vld [vmem:[#allocation10] sm:$0xff]
    %v1138 = vld [vmem:[#allocation10 + $0x8] sm:$0xff]
    %v1139 = vld [vmem:[#allocation10 + $0x10] sm:$0xff]
    %v1140 = vld [vmem:[#allocation10 + $0x18] sm:$0xff]
    %v1141 = vld [vmem:[#allocation10 + $0x20] sm:$0xff]
    %v1142 = vld [vmem:[#allocation10 + $0x28] sm:$0xff]
    %v1143 = vld [vmem:[#allocation10 + $0x30] sm:$0xff]
    %v1144 = vld [vmem:[#allocation10 + $0x38] sm:$0xff]
    %v1145 = vld [vmem:[#allocation10 + $0x40] sm:$0xff]
    %v1146 = vld [vmem:[#allocation10 + $0x48] sm:$0xff]
    %v1147 = vld [vmem:[#allocation10 + $0x50] sm:$0xff]
    %v1148 = vld [vmem:[#allocation10 + $0x58] sm:$0xff]
    %v1149 = vld [vmem:[#allocation10 + $0x60] sm:$0xff]
    %v1150 = vld [vmem:[#allocation10 + $0x68] sm:$0xff]
    %v1151 = vld [vmem:[#allocation10 + $0x70] sm:$0xff]
    %v1152 = vld [vmem:[#allocation10 + $0x78] sm:$0xff]
    %v1153 = vld [vmem:[%s7] sm:$0x1]
    %v1155 = vlaneseq
    %v1156 = vshrl.u32 %v1155, 7
    %v1157 = vsub.s32 0, %v1156
    %v1158 = vrot.slane %v1153, %v1157
    %1160 = vmatprep.subr.mxu0 0.0
    %1161 = vmatpush1.msra.mxu0 %v1152
    %1162 = vmatprep.subr.mxu0 0.0
    %1163 = vmatpush1.msra.mxu0 %v1151
    %1164 = vmatprep.subr.mxu0 0.0
    %1165 = vmatpush1.msra.mxu0 %v1150
    %1166 = vmatprep.subr.mxu0 0.0
    %1167 = vmatpush1.msra.mxu0 %v1149
    %1168 = vmatprep.subr.mxu0 0.0
    %1169 = vmatpush1.msra.mxu0 %v1148
    %1170 = vmatprep.subr.mxu0 0.0
    %1171 = vmatpush1.msra.mxu0 %v1147
    %1172 = vmatprep.subr.mxu0 0.0
    %1173 = vmatpush1.msra.mxu0 %v1146
    %1174 = vmatprep.subr.mxu0 0.0
    %1175 = vmatpush1.msra.mxu0 %v1145
    %1176 = vmatprep.subr.mxu0 0.0
    %1177 = vmatpush1.msra.mxu0 %v1144
    %1178 = vmatprep.subr.mxu0 0.0
    %1179 = vmatpush1.msra.mxu0 %v1143
    %1180 = vmatprep.subr.mxu0 0.0
    %1181 = vmatpush1.msra.mxu0 %v1142
    %1182 = vmatprep.subr.mxu0 0.0
    %1183 = vmatpush1.msra.mxu0 %v1141
    %1184 = vmatprep.subr.mxu0 0.0
    %1185 = vmatpush1.msra.mxu0 %v1140
    %1186 = vmatprep.subr.mxu0 0.0
    %1187 = vmatpush1.msra.mxu0 %v1139
    %1188 = vmatprep.subr.mxu0 0.0
    %1189 = vmatpush1.msra.mxu0 %v1138
    %1190 = vmatprep.subr.mxu0 0.0
    %1191 = vmatpush1.msra.mxu0 %v1137
    %1192 = vmatprep.subr.mxu0 0.0
    %1193 = vmatpush2.msra.mxu0 0.0
    %1194 = vmatprep.subr.mxu0 0.0
    %1195 = vmatpush2.msra.mxu0 0.0
    %1196 = vmatprep.subr.mxu0 0.0
    %1197 = vmatpush2.msra.mxu0 0.0
    %1198 = vmatprep.subr.mxu0 0.0
    %1199 = vmatpush2.msra.mxu0 0.0
    %1200 = vmatprep.subr.mxu0 0.0
    %1201 = vmatpush2.msra.mxu0 0.0
    %1202 = vmatprep.subr.mxu0 0.0
    %1203 = vmatpush2.msra.mxu0 0.0
    %1204 = vmatprep.subr.mxu0 0.0
    %1205 = vmatpush2.msra.mxu0 0.0
    %1206 = vmatprep.subr.mxu0 0.0
    %1207 = vmatpush2.msra.mxu0 0.0
    %1208 = vmatprep.subr.mxu0 0.0
    %1209 = vmatpush2.msra.mxu0 0.0
    %1210 = vmatprep.subr.mxu0 0.0
    %1211 = vmatpush2.msra.mxu0 0.0
    %1212 = vmatprep.subr.mxu0 0.0
    %1213 = vmatpush2.msra.mxu0 0.0
    %1214 = vmatprep.subr.mxu0 0.0
    %1215 = vmatpush2.msra.mxu0 0.0
    %1216 = vmatprep.subr.mxu0 0.0
    %1217 = vmatpush2.msra.mxu0 0.0
    %1218 = vmatprep.subr.mxu0 0.0
    %1219 = vmatpush2.msra.mxu0 0.0
    %1220 = vmatprep.subr.mxu0 0.0
    %1221 = vmatpush2.msra.mxu0 0.0
    %1222 = vmatprep.subr.mxu0 0.0
    %1223 = vmatpush2.msra.mxu0 0.0
    %1224 = vmatprep.mubr.f32.mxu0 0.0
    %1225 = vmatmul.mubr.f32.gmra.mxu0 %v1134
    %v1226 = vpop.f32.mrf.mxu0
    %v1227 = vadd.f32 %v1158, %v1226
    %v1228 = vpop.f32.mrf.mxu0
    %1229 = vdwg.mxu0
    %v1230 = vld [vmem:[%s8] sm:$0xff]
    %v1231 = vmul.f32 %v1227, %v1230
    %v1232 = vld [vmem:[#allocation11] sm:$0xff]
    %v1233 = vld [vmem:[#allocation11 + $0x8] sm:$0xff]
    %v1234 = vld [vmem:[#allocation11 + $0x10] sm:$0xff]
    %v1235 = vld [vmem:[#allocation11 + $0x18] sm:$0xff]
    %v1236 = vld [vmem:[#allocation11 + $0x20] sm:$0xff]
    %v1237 = vld [vmem:[#allocation11 + $0x28] sm:$0xff]
    %v1238 = vld [vmem:[#allocation11 + $0x30] sm:$0xff]
    %v1239 = vld [vmem:[#allocation11 + $0x38] sm:$0xff]
    %v1240 = vld [vmem:[#allocation11 + $0x40] sm:$0xff]
    %v1241 = vld [vmem:[#allocation11 + $0x48] sm:$0xff]
    %v1242 = vld [vmem:[#allocation11 + $0x50] sm:$0xff]
    %v1243 = vld [vmem:[#allocation11 + $0x58] sm:$0xff]
    %v1244 = vld [vmem:[#allocation11 + $0x60] sm:$0xff]
    %v1245 = vld [vmem:[#allocation11 + $0x68] sm:$0xff]
    %v1246 = vld [vmem:[#allocation11 + $0x70] sm:$0xff]
    %v1247 = vld [vmem:[#allocation11 + $0x78] sm:$0xff]
    %v1248 = vld [vmem:[%s10] sm:$0x1]
    %v1250 = vlaneseq
    %v1251 = vshrl.u32 %v1250, 7
    %v1252 = vsub.s32 0, %v1251
    %v1253 = vrot.slane %v1248, %v1252
    %1255 = vmatprep.subr.mxu0 0.0
    %1256 = vmatpush1.msra.mxu0 %v1247
    %1257 = vmatprep.subr.mxu0 0.0
    %1258 = vmatpush1.msra.mxu0 %v1246
    %1259 = vmatprep.subr.mxu0 0.0
    %1260 = vmatpush1.msra.mxu0 %v1245
    %1261 = vmatprep.subr.mxu0 0.0
    %1262 = vmatpush1.msra.mxu0 %v1244
    %1263 = vmatprep.subr.mxu0 0.0
    %1264 = vmatpush1.msra.mxu0 %v1243
    %1265 = vmatprep.subr.mxu0 0.0
    %1266 = vmatpush1.msra.mxu0 %v1242
    %1267 = vmatprep.subr.mxu0 0.0
    %1268 = vmatpush1.msra.mxu0 %v1241
    %1269 = vmatprep.subr.mxu0 0.0
    %1270 = vmatpush1.msra.mxu0 %v1240
    %1271 = vmatprep.subr.mxu0 0.0
    %1272 = vmatpush1.msra.mxu0 %v1239
    %1273 = vmatprep.subr.mxu0 0.0
    %1274 = vmatpush1.msra.mxu0 %v1238
    %1275 = vmatprep.subr.mxu0 0.0
    %1276 = vmatpush1.msra.mxu0 %v1237
    %1277 = vmatprep.subr.mxu0 0.0
    %1278 = vmatpush1.msra.mxu0 %v1236
    %1279 = vmatprep.subr.mxu0 0.0
    %1280 = vmatpush1.msra.mxu0 %v1235
    %1281 = vmatprep.subr.mxu0 0.0
    %1282 = vmatpush1.msra.mxu0 %v1234
    %1283 = vmatprep.subr.mxu0 0.0
    %1284 = vmatpush1.msra.mxu0 %v1233
    %1285 = vmatprep.subr.mxu0 0.0
    %1286 = vmatpush1.msra.mxu0 %v1232
    %1287 = vmatprep.subr.mxu0 0.0
    %1288 = vmatpush2.msra.mxu0 0.0
    %1289 = vmatprep.subr.mxu0 0.0
    %1290 = vmatpush2.msra.mxu0 0.0
    %1291 = vmatprep.subr.mxu0 0.0
    %1292 = vmatpush2.msra.mxu0 0.0
    %1293 = vmatprep.subr.mxu0 0.0
    %1294 = vmatpush2.msra.mxu0 0.0
    %1295 = vmatprep.subr.mxu0 0.0
    %1296 = vmatpush2.msra.mxu0 0.0
    %1297 = vmatprep.subr.mxu0 0.0
    %1298 = vmatpush2.msra.mxu0 0.0
    %1299 = vmatprep.subr.mxu0 0.0
    %1300 = vmatpush2.msra.mxu0 0.0
    %1301 = vmatprep.subr.mxu0 0.0
    %1302 = vmatpush2.msra.mxu0 0.0
    %1303 = vmatprep.subr.mxu0 0.0
    %1304 = vmatpush2.msra.mxu0 0.0
    %1305 = vmatprep.subr.mxu0 0.0
    %1306 = vmatpush2.msra.mxu0 0.0
    %1307 = vmatprep.subr.mxu0 0.0
    %1308 = vmatpush2.msra.mxu0 0.0
    %1309 = vmatprep.subr.mxu0 0.0
    %1310 = vmatpush2.msra.mxu0 0.0
    %1311 = vmatprep.subr.mxu0 0.0
    %1312 = vmatpush2.msra.mxu0 0.0
    %1313 = vmatprep.subr.mxu0 0.0
    %1314 = vmatpush2.msra.mxu0 0.0
    %1315 = vmatprep.subr.mxu0 0.0
    %1316 = vmatpush2.msra.mxu0 0.0
    %1317 = vmatprep.subr.mxu0 0.0
    %1318 = vmatpush2.msra.mxu0 0.0
    %1319 = vmatprep.mubr.f32.mxu0 0.0
    %1320 = vmatmul.mubr.f32.gmra.mxu0 %v1231
    %v1321 = vpop.f32.mrf.mxu0
    %v1322 = vadd.f32 %v1253, %v1321
    %v1323 = vpop.f32.mrf.mxu0
    %1324 = vdwg.mxu0
    %1325 = vst [vmem:[#allocation13] sm:$0xff] %v1322
    // Predicated region
    $region70: #{tpu_custom_call.1} parent=1 // pred_check
      _
    $region71: #{tpu_custom_call.1} parent=1 // pred_check_branch
      %1327 = sbr.rel (0) target = $region73
    $region72: #{tpu_custom_call.1} parent=1 // pred_region
      %s1329 = ssub.s32 128, 128
      %1330 = vsyncadd [#allocation4], %s1329
      %s1332 = sshll.u32 [#allocation13], 4
      %s1333 = int_to_ptr.vmem [resolvable:$true] %s1332
      %1335 = dma.vmem_to_hbm [thread:$0]  %s1333, 128, %s11, [#allocation4]
    $region73: #{tpu_custom_call.1} parent=1 // pred_fallthru
      _
    // Predicated region
    $region74: #{tpu_custom_call.1} parent=1 // pred_check
      _
    $region75: #{tpu_custom_call.1} parent=1 // pred_check_branch
      %1337 = sbr.rel (0) target = $region77
    $region76: #{tpu_custom_call.1} parent=1 // pred_region
      %1338 = dma.done [#allocation4], 128
    $region77: #{tpu_custom_call.1} parent=1 // pred_fallthru
      _
    %1339 = vsyncpa [#allocation3], 1
    %1340 = vsyncpa [#allocation6], 1
    %1341 = vsyncpa [#allocation9], 1
    %1342 = vsyncpa [#allocation12], 1
    %1343 = vsyncpa [#allocation4], 1

</llo_original>
